<compile_context>
chip_gen: v5e
topology: v5e:2x2
jax: 0.10.0
libtpu: 0.0.40
codegen_flags: <defaults>
</compile_context>

<pallas_src>
import functools

import jax
import jax.numpy as jnp
from jax import lax
from jax.experimental import pallas as pl
from jax.experimental.pallas import tpu as pltpu

# cfg constants from AdvancedEAST's cfg.py
EPS = 1e-4
LAMBDA_INSIDE_SCORE_LOSS = 4.0
LAMBDA_SIDE_VERTEX_CODE_LOSS = 1.0
LAMBDA_SIDE_VERTEX_COORD_LOSS = 1.0

_N_ROWS = 9                         # partial-sum rows produced by the kernel
_TARGET_BLOCK_ELEMS = 512 * 128     # ~1.75 MiB f32 per 7-channel input block


def _east_partials_kernel(gt_ref, pred_ref, out_ref, *,
                          s, w, ch, h,
                          chunks_full, chunks_last, mask_last,
                          needs_tail, r_inner, n_row_blocks):
    """gt_ref / pred_ref: (7, s, w) VMEM blocks.  out_ref: (9, ch, w) accumulator."""
    ro = pl.program_id(1)
    ri = pl.program_id(2)

    @pl.when(ri == 0)
    def _():
        out_ref[...] = jnp.zeros_like(out_ref)

    row0 = (ro * r_inner + ri) * s          # first H-row covered by this block

    def chunk_rows(off, masked):
        f32 = jnp.float32

        def ld(ref, c):
            return ref[c, pl.ds(off, ch), :].astype(f32)

        # ---- inside-score (balanced BCE) partials, channel 0 ----
        gt0 = ld(gt_ref, 0)
        pr0 = ld(pred_ref, 0)
        is_pos0 = gt0 == 1.0
        # Merged log (exact for binary {0,1} masks): sigmoid(-x) == 1 - sigmoid(x).
        l0 = jnp.log(jax.nn.sigmoid(jnp.where(is_pos0, pr0, -pr0)) + EPS)
        row_a = gt0 * l0                      # labels * log(p + eps)
        row_b = (1.0 - gt0) * l0              # (1 - labels) * log(1 - p + eps)
        pos_w = is_pos0.astype(f32)           # positive_weights

        # ---- side-vertex-code partials, channels 1, 2 ----
        gt1 = ld(gt_ref, 1)
        pr1 = ld(pred_ref, 1)
        gt2 = ld(gt_ref, 2)
        pr2 = ld(pred_ref, 2)
        l1 = jnp.log(jax.nn.sigmoid(jnp.where(gt1 == 1.0, pr1, -pr1)) + EPS)
        l2 = jnp.log(jax.nn.sigmoid(jnp.where(gt2 == 1.0, pr2, -pr2)) + EPS)
        row_s1 = (gt1 * l1 + gt2 * l2) * pos_w
        row_s2 = ((1.0 - gt1) * l1 + (1.0 - gt2) * l2) * pos_w
        v_w = (gt1 == 1.0).astype(f32)        # vertex_weights

        # ---- side-vertex-coord (smooth L1 / quad_norm) partials, ch 3-6 ----
        gt3 = ld(gt_ref, 3)
        pr3 = ld(pred_ref, 3)
        gt4 = ld(gt_ref, 4)
        pr4 = ld(pred_ref, 4)
        gt5 = ld(gt_ref, 5)
        pr5 = ld(pred_ref, 5)
        gt6 = ld(gt_ref, 6)
        pr6 = ld(pred_ref, 6)

        def smooth_l1(p, g):
            ad = jnp.abs(p - g)
            return jnp.where(ad < 1.0, 0.5 * ad * ad, ad - 0.5)

        sl1 = (smooth_l1(pr3, gt3) + smooth_l1(pr4, gt4)
               + smooth_l1(pr5, gt5) + smooth_l1(pr6, gt6))
        dx = gt3 - gt5
        dy = gt4 - gt6
        n_q = jnp.sqrt(dx * dx + dy * dy) * 4.0 + EPS
        row_l1 = sl1 * v_w * pl.reciprocal(n_q, approx=True)

        rows = (gt0, row_a, row_b, gt1, row_s1, row_s2, pos_w, row_l1, v_w)
        if masked:
            # Only the globally-last row block can reach out-of-bounds rows;
            # select (not multiply) so undefined / NaN data never leaks in.
            grow = row0 + off + lax.broadcasted_iota(jnp.int32, (ch, w), 0)
            valid = grow < h
            rows = tuple(jnp.where(valid, x, 0.0) for x in rows)
        return rows

    def run(n_chunks, masked):
        def body(ci, accs):
            off = pl.multiple_of(ci * ch, ch)
            rows = chunk_rows(off, masked)
            return tuple(a + x for a, x in zip(accs, rows))

        init = tuple(jnp.zeros((ch, w), jnp.float32) for _ in range(_N_ROWS))
        if w <= 128 and n_chunks > 1:
            accs = lax.fori_loop(0, n_chunks, body, init, unroll=2)
        else:
            accs = lax.fori_loop(0, n_chunks, body, init)
        for i, a in enumerate(accs):
            out_ref[i] += a

    if not needs_tail:
        run(chunks_full, False)
    elif n_row_blocks == 1:
        run(chunks_last, mask_last)
    else:
        is_last = jnp.logical_and(ro == pl.num_programs(1) - 1,
                                  ri == pl.num_programs(2) - 1)

        @pl.when(jnp.logical_not(is_last))
        def _():
            run(chunks_full, False)

        @pl.when(is_last)
        def _():
            run(chunks_last, mask_last)


def east_loss(gt, pred, *, block_elems=_TARGET_BLOCK_ELEMS):
    """gt, pred: (N, 7, H, W) arrays (NCHW, like the PyTorch module)."""
    N, C, H, W = gt.shape
    assert C == 7 and pred.shape == gt.shape
    total = N * H * W

    # bf16 passes straight through (halves HBM traffic); kernel upcasts to f32.
    if gt.dtype not in (jnp.float32, jnp.bfloat16):
        gt = gt.astype(jnp.float32)
    if pred.dtype not in (jnp.float32, jnp.bfloat16):
        pred = pred.astype(jnp.float32)

    # Row-chunk granularity along H (sublane aligned).
    ch = 8 if H >= 8 else H
    chunks_total = -(-H // ch)
    lanes = -(-W // 128) * 128                       # lane-padded VMEM width
    target_rows = max(ch, (block_elems // lanes) // ch * ch)
    chunks_per_block = max(1, min(chunks_total, target_rows // ch))
    s = chunks_per_block * ch                        # block rows along H
    n_row_blocks = -(-chunks_total // chunks_per_block)
    chunks_last = chunks_total - (n_row_blocks - 1) * chunks_per_block
    mask_last = (H % ch) != 0
    needs_tail = mask_last or (chunks_last != chunks_per_block)

    # Split the row-block axis so odd/small N can still use both v7x cores.
    r_outer = 2 if (N % 2 == 1 and n_row_blocks % 2 == 0) else 1
    r_inner = n_row_blocks // r_outer

    kernel = functools.partial(
        _east_partials_kernel,
        s=s, w=W, ch=ch, h=H,
        chunks_full=chunks_per_block, chunks_last=chunks_last,
        mask_last=mask_last, needs_tail=needs_tail,
        r_inner=r_inner, n_row_blocks=n_row_blocks)

    in_spec = pl.BlockSpec(
        (pl.Squeezed(), 7, s, W),
        lambda n, ro, ri: (n, 0, ro * r_inner + ri, 0))
    out_spec = pl.BlockSpec(
        (pl.Squeezed(), _N_ROWS, ch, W),
        lambda n, ro, ri: (n * r_outer + ro, 0, 0, 0))

    partials = pl.pallas_call(
        kernel,
        out_shape=jax.ShapeDtypeStruct((N * r_outer, _N_ROWS, ch, W),
                                       jnp.float32),
        grid=(N, r_outer, r_inner),
        in_specs=[in_spec, in_spec],
        out_specs=out_spec,
        compiler_params=pltpu.CompilerParams(
            # Per-(image, row-outer) accumulator block -> first two axes are
            # parallel (megacore-safe); the row-inner axis is the reduction.
            dimension_semantics=("parallel", "parallel", "arbitrary")),
    )(gt, pred)

    sums = jnp.sum(partials, axis=(0, 2, 3))  # (9,) fold of the tiny partials
    s_labels, s_a, s_b, s_gt1, s_s1, s_s2, s_pw, s_l1, s_vw = [
        sums[k] for k in range(_N_ROWS)
    ]

    total_f = jnp.float32(total)
    mean_labels = s_labels / total_f
    beta = 1.0 - mean_labels
    inside_score_loss = -(beta * s_a + (1.0 - beta) * s_b) / total_f
    inside_score_loss = inside_score_loss * LAMBDA_INSIDE_SCORE_LOSS

    vertex_beta = 1.0 - (s_gt1 / total_f) / (mean_labels + EPS)
    side_vertex_code_loss = -(vertex_beta * s_s1
                              + (1.0 - vertex_beta) * s_s2) / (s_pw + EPS)
    side_vertex_code_loss = side_vertex_code_loss * LAMBDA_SIDE_VERTEX_CODE_LOSS

    side_vertex_coord_loss = s_l1 / (s_vw + EPS) * LAMBDA_SIDE_VERTEX_COORD_LOSS

    # TODO(synk): the PyTorch forward also prints the three sub-losses (host I/O).
    return inside_score_loss + side_vertex_code_loss + side_vertex_coord_loss


def east_loss_ref(gt, pred):
    """Pure-JAX mirror of the PyTorch forward, for verification."""
    gt = gt.astype(jnp.float32)
    pred = pred.astype(jnp.float32)
    logits, labels = pred[:, :1], gt[:, :1]
    beta = 1.0 - jnp.mean(labels)
    p = jax.nn.sigmoid(logits)
    inside = jnp.mean(-(beta * labels * jnp.log(p + EPS)
                        + (1.0 - beta) * (1.0 - labels) * jnp.log(1.0 - p + EPS)))
    inside = inside * LAMBDA_INSIDE_SCORE_LOSS

    vl, vlog = gt[:, 1:3], pred[:, 1:3]
    vb = 1.0 - jnp.mean(gt[:, 1:2]) / (jnp.mean(labels) + EPS)
    vp = jax.nn.sigmoid(vlog)
    pos = -vb * vl * jnp.log(vp + EPS)
    neg = -(1.0 - vb) * (1.0 - vl) * jnp.log(1.0 - vp + EPS)
    pw = (gt[:, 0] == 1.0).astype(jnp.float32)
    code = jnp.sum(jnp.sum(pos + neg, axis=1) * pw) / (jnp.sum(pw) + EPS)
    code = code * LAMBDA_SIDE_VERTEX_CODE_LOSS

    g_hat, g_true = pred[:, 3:7], gt[:, 3:7]
    vw = (gt[:, 1] == 1.0).astype(jnp.float32)
    t = jnp.transpose(g_true, (0, 2, 3, 1)).reshape(-1, 2, 2)
    d = t[:, 0, :] - t[:, 1, :]
    n_q = (jnp.sqrt(jnp.sum(d * d, axis=1)) * 4.0 + EPS).reshape(vw.shape)
    ad = jnp.abs(g_hat - g_true)
    sl1 = jnp.where(ad < 1.0, 0.5 * ad * ad, ad - 0.5)
    pixel = jnp.sum(sl1, axis=1) / n_q * vw
    coord = jnp.sum(pixel) / (jnp.sum(vw) + EPS) * LAMBDA_SIDE_VERTEX_COORD_LOSS
    return inside + code + coord


if __name__ == "__main__":
    key = jax.random.PRNGKey(0)

    def make_inputs(k, n, h, w):
        k1, k2, k3 = jax.random.split(k, 3)
        # gt: first 3 channels binary masks, last 4 channels geometry deltas.
        mask = (jax.random.uniform(k1, (n, 3, h, w)) > 0.5).astype(jnp.float32)
        geo = jax.random.normal(k2, (n, 4, h, w), dtype=jnp.float32) * 2.0
        gt = jnp.concatenate([mask, geo], axis=1)
        pred = jax.random.normal(k3, (n, 7, h, w), dtype=jnp.float32)
        return gt, pred

    k_a, k_b = jax.random.split(key)

    # Case 1: aligned shape, single row-block per image.
    gt, pred = make_inputs(k_a, 2, 16, 16)
    out = jax.block_until_ready(east_loss(gt, pred))
    ref = east_loss_ref(gt, pred)
    assert out.shape == () and bool(jnp.isfinite(out))
    assert jnp.allclose(out, ref, rtol=1e-3, atol=1e-3), (out, ref)

    # Case 2: ragged H (46 % 8 != 0), multiple row-blocks, odd N -> r_outer
    # split; exercises the masked tail path with small forced blocks.
    gt2, pred2 = make_inputs(k_b, 1, 46, 46)
    out2 = jax.block_until_ready(east_loss(gt2, pred2, block_elems=3072))
    ref2 = east_loss_ref(gt2, pred2)
    assert out2.shape == () and bool(jnp.isfinite(out2))
    assert jnp.allclose(out2, ref2, rtol=1e-3, atol=1e-3), (out2, ref2)

    print("KERNEL_OK")
</pallas_src>

<mosaic_0001>
module attributes {stable_mosaic.version = 11 : i64} {
  func.func @_east_partials_kernel(%arg0: i32, %arg1: i32, %arg2: i32, %arg3: memref<1x7x16x16xf32, #tpu.memory_space<vmem>>, %arg4: memref<1x7x16x16xf32, #tpu.memory_space<vmem>>, %arg5: memref<1x9x8x16xf32, #tpu.memory_space<vmem>>) attributes {dimension_semantics = [#tpu.dimension_semantics<parallel>, #tpu.dimension_semantics<parallel>, #tpu.dimension_semantics<arbitrary>], iteration_bounds = array<i64: 2, 1, 1>, scalar_prefetch = 0 : i64, scratch_operands = 0 : i64, tpu.core_type = #tpu.core_type<tc>, window_params = [{transform_indices = @transform_0, window_bounds = array<i64: 1, 7, 16, 16>}, {transform_indices = @transform_1, window_bounds = array<i64: 1, 7, 16, 16>}, {transform_indices = @transform_2, window_bounds = array<i64: 1, 9, 8, 16>}]} {
    %c0_i32 = arith.constant 0 : i32
    %0 = arith.cmpi eq, %arg2, %c0_i32 : i32
    %1 = arith.extui %0 : i1 to i32
    %c0_i32_0 = arith.constant 0 : i32
    %2 = arith.cmpi ne, %1, %c0_i32_0 : i32
    scf.if %2 {
      %cst_218 = arith.constant 0.000000e+00 : f32
      %406 = vector.broadcast %cst_218 : f32 to vector<9x8x16xf32>
      %c0_219 = arith.constant 0 : index
      %c0_220 = arith.constant 0 : index
      %c0_221 = arith.constant 0 : index
      %c0_222 = arith.constant 0 : index
      %407 = vector.load %arg5[%c0_219, %c0_220, %c0_221, %c0_222] : memref<1x9x8x16xf32, #tpu.memory_space<vmem>>, vector<1x9x8x16xf32>
      %408 = vector.shape_cast %407 : vector<1x9x8x16xf32> to vector<9x8x16xf32>
      %409 = vector.shape_cast %406 : vector<9x8x16xf32> to vector<1x9x8x16xf32>
      tpu.vector_store %arg5[%c0_219, %c0_220, %c0_221, %c0_222], %409 {strides = array<i32>} : memref<1x9x8x16xf32, #tpu.memory_space<vmem>>, vector<1x9x8x16xf32>,
    } else {
    }
    %cst = arith.constant 0.000000e+00 : f32
    %3 = vector.broadcast %cst : f32 to vector<8x16xf32>
    %cst_1 = arith.constant 0.000000e+00 : f32
    %4 = vector.broadcast %cst_1 : f32 to vector<8x16xf32>
    %cst_2 = arith.constant 0.000000e+00 : f32
    %5 = vector.broadcast %cst_2 : f32 to vector<8x16xf32>
    %cst_3 = arith.constant 0.000000e+00 : f32
    %6 = vector.broadcast %cst_3 : f32 to vector<8x16xf32>
    %cst_4 = arith.constant 0.000000e+00 : f32
    %7 = vector.broadcast %cst_4 : f32 to vector<8x16xf32>
    %cst_5 = arith.constant 0.000000e+00 : f32
    %8 = vector.broadcast %cst_5 : f32 to vector<8x16xf32>
    %cst_6 = arith.constant 0.000000e+00 : f32
    %9 = vector.broadcast %cst_6 : f32 to vector<8x16xf32>
    %cst_7 = arith.constant 0.000000e+00 : f32
    %10 = vector.broadcast %cst_7 : f32 to vector<8x16xf32>
    %cst_8 = arith.constant 0.000000e+00 : f32
    %11 = vector.broadcast %cst_8 : f32 to vector<8x16xf32>
    %c0_i32_9 = arith.constant 0 : i32
    %c8_i32 = arith.constant 8 : i32
    %12 = arith.muli %c0_i32_9, %c8_i32 : i32
    %13 = tpu.assume_multiple %12, 8 : i32
    %c0 = arith.constant 0 : index
    %c0_10 = arith.constant 0 : index
    %14 = arith.index_cast %13 : i32 to index
    %c0_11 = arith.constant 0 : index
    %15 = vector.load %arg3[%c0, %c0_10, %14, %c0_11] : memref<1x7x16x16xf32, #tpu.memory_space<vmem>>, vector<1x1x8x16xf32>
    %16 = vector.shape_cast %15 : vector<1x1x8x16xf32> to vector<8x16xf32>
    %c0_12 = arith.constant 0 : index
    %c0_13 = arith.constant 0 : index
    %17 = arith.index_cast %13 : i32 to index
    %c0_14 = arith.constant 0 : index
    %18 = vector.load %arg4[%c0_12, %c0_13, %17, %c0_14] : memref<1x7x16x16xf32, #tpu.memory_space<vmem>>, vector<1x1x8x16xf32>
    %19 = vector.shape_cast %18 : vector<1x1x8x16xf32> to vector<8x16xf32>
    %cst_15 = arith.constant 1.000000e+00 : f32
    %20 = vector.broadcast %cst_15 : f32 to vector<8x16xf32>
    %21 = arith.cmpf oeq, %16, %20 : vector<8x16xf32>
    %cst_16 = arith.constant 0.000000e+00 : f32
    %22 = vector.broadcast %cst_16 : f32 to vector<8x16xf32>
    %23 = arith.subf %22, %19 : vector<8x16xf32>
    %24 = arith.select %21, %19, %23 : vector<8x16xi1>, vector<8x16xf32>
    %25 = arith.negf %24 : vector<8x16xf32>
    %26 = math.exp %25 : vector<8x16xf32>
    %cst_17 = arith.constant 1.000000e+00 : f32
    %27 = vector.broadcast %cst_17 : f32 to vector<8x16xf32>
    %28 = arith.addf %27, %26 : vector<8x16xf32>
    %29 = arith.divf %27, %28 : vector<8x16xf32>
    %cst_18 = arith.constant 9.99999974E-5 : f32
    %30 = vector.broadcast %cst_18 : f32 to vector<8x16xf32>
    %31 = arith.addf %29, %30 : vector<8x16xf32>
    %32 = math.log %31 : vector<8x16xf32>
    %33 = arith.mulf %16, %32 : vector<8x16xf32>
    %cst_19 = arith.constant 1.000000e+00 : f32
    %34 = vector.broadcast %cst_19 : f32 to vector<8x16xf32>
    %35 = arith.subf %34, %16 : vector<8x16xf32>
    %36 = arith.mulf %35, %32 : vector<8x16xf32>
    %37 = arith.extui %21 : vector<8x16xi1> to vector<8x16xi32>
    %38 = arith.sitofp %37 : vector<8x16xi32> to vector<8x16xf32>
    %c0_20 = arith.constant 0 : index
    %c1 = arith.constant 1 : index
    %39 = arith.index_cast %13 : i32 to index
    %c0_21 = arith.constant 0 : index
    %40 = vector.load %arg3[%c0_20, %c1, %39, %c0_21] : memref<1x7x16x16xf32, #tpu.memory_space<vmem>>, vector<1x1x8x16xf32>
    %41 = vector.shape_cast %40 : vector<1x1x8x16xf32> to vector<8x16xf32>
    %c0_22 = arith.constant 0 : index
    %c1_23 = arith.constant 1 : index
    %42 = arith.index_cast %13 : i32 to index
    %c0_24 = arith.constant 0 : index
    %43 = vector.load %arg4[%c0_22, %c1_23, %42, %c0_24] : memref<1x7x16x16xf32, #tpu.memory_space<vmem>>, vector<1x1x8x16xf32>
    %44 = vector.shape_cast %43 : vector<1x1x8x16xf32> to vector<8x16xf32>
    %c0_25 = arith.constant 0 : index
    %c2 = arith.constant 2 : index
    %45 = arith.index_cast %13 : i32 to index
    %c0_26 = arith.constant 0 : index
    %46 = vector.load %arg3[%c0_25, %c2, %45, %c0_26] : memref<1x7x16x16xf32, #tpu.memory_space<vmem>>, vector<1x1x8x16xf32>
    %47 = vector.shape_cast %46 : vector<1x1x8x16xf32> to vector<8x16xf32>
    %c0_27 = arith.constant 0 : index
    %c2_28 = arith.constant 2 : index
    %48 = arith.index_cast %13 : i32 to index
    %c0_29 = arith.constant 0 : index
    %49 = vector.load %arg4[%c0_27, %c2_28, %48, %c0_29] : memref<1x7x16x16xf32, #tpu.memory_space<vmem>>, vector<1x1x8x16xf32>
    %50 = vector.shape_cast %49 : vector<1x1x8x16xf32> to vector<8x16xf32>
    %cst_30 = arith.constant 1.000000e+00 : f32
    %51 = vector.broadcast %cst_30 : f32 to vector<8x16xf32>
    %52 = arith.cmpf oeq, %41, %51 : vector<8x16xf32>
    %cst_31 = arith.constant 0.000000e+00 : f32
    %53 = vector.broadcast %cst_31 : f32 to vector<8x16xf32>
    %54 = arith.subf %53, %44 : vector<8x16xf32>
    %55 = arith.select %52, %44, %54 : vector<8x16xi1>, vector<8x16xf32>
    %56 = arith.negf %55 : vector<8x16xf32>
    %57 = math.exp %56 : vector<8x16xf32>
    %cst_32 = arith.constant 1.000000e+00 : f32
    %58 = vector.broadcast %cst_32 : f32 to vector<8x16xf32>
    %59 = arith.addf %58, %57 : vector<8x16xf32>
    %60 = arith.divf %58, %59 : vector<8x16xf32>
    %cst_33 = arith.constant 9.99999974E-5 : f32
    %61 = vector.broadcast %cst_33 : f32 to vector<8x16xf32>
    %62 = arith.addf %60, %61 : vector<8x16xf32>
    %63 = math.log %62 : vector<8x16xf32>
    %cst_34 = arith.constant 1.000000e+00 : f32
    %64 = vector.broadcast %cst_34 : f32 to vector<8x16xf32>
    %65 = arith.cmpf oeq, %47, %64 : vector<8x16xf32>
    %cst_35 = arith.constant 0.000000e+00 : f32
    %66 = vector.broadcast %cst_35 : f32 to vector<8x16xf32>
    %67 = arith.subf %66, %50 : vector<8x16xf32>
    %68 = arith.select %65, %50, %67 : vector<8x16xi1>, vector<8x16xf32>
    %69 = arith.negf %68 : vector<8x16xf32>
    %70 = math.exp %69 : vector<8x16xf32>
    %cst_36 = arith.constant 1.000000e+00 : f32
    %71 = vector.broadcast %cst_36 : f32 to vector<8x16xf32>
    %72 = arith.addf %71, %70 : vector<8x16xf32>
    %73 = arith.divf %71, %72 : vector<8x16xf32>
    %cst_37 = arith.constant 9.99999974E-5 : f32
    %74 = vector.broadcast %cst_37 : f32 to vector<8x16xf32>
    %75 = arith.addf %73, %74 : vector<8x16xf32>
    %76 = math.log %75 : vector<8x16xf32>
    %77 = arith.mulf %41, %63 : vector<8x16xf32>
    %78 = arith.mulf %47, %76 : vector<8x16xf32>
    %79 = arith.addf %77, %78 : vector<8x16xf32>
    %80 = arith.mulf %79, %38 : vector<8x16xf32>
    %cst_38 = arith.constant 1.000000e+00 : f32
    %81 = vector.broadcast %cst_38 : f32 to vector<8x16xf32>
    %82 = arith.subf %81, %41 : vector<8x16xf32>
    %83 = arith.mulf %82, %63 : vector<8x16xf32>
    %cst_39 = arith.constant 1.000000e+00 : f32
    %84 = vector.broadcast %cst_39 : f32 to vector<8x16xf32>
    %85 = arith.subf %84, %47 : vector<8x16xf32>
    %86 = arith.mulf %85, %76 : vector<8x16xf32>
    %87 = arith.addf %83, %86 : vector<8x16xf32>
    %88 = arith.mulf %87, %38 : vector<8x16xf32>
    %cst_40 = arith.constant 1.000000e+00 : f32
    %89 = vector.broadcast %cst_40 : f32 to vector<8x16xf32>
    %90 = arith.cmpf oeq, %41, %89 : vector<8x16xf32>
    %91 = arith.extui %90 : vector<8x16xi1> to vector<8x16xi32>
    %92 = arith.sitofp %91 : vector<8x16xi32> to vector<8x16xf32>
    %c0_41 = arith.constant 0 : index
    %c3 = arith.constant 3 : index
    %93 = arith.index_cast %13 : i32 to index
    %c0_42 = arith.constant 0 : index
    %94 = vector.load %arg3[%c0_41, %c3, %93, %c0_42] : memref<1x7x16x16xf32, #tpu.memory_space<vmem>>, vector<1x1x8x16xf32>
    %95 = vector.shape_cast %94 : vector<1x1x8x16xf32> to vector<8x16xf32>
    %c0_43 = arith.constant 0 : index
    %c3_44 = arith.constant 3 : index
    %96 = arith.index_cast %13 : i32 to index
    %c0_45 = arith.constant 0 : index
    %97 = vector.load %arg4[%c0_43, %c3_44, %96, %c0_45] : memref<1x7x16x16xf32, #tpu.memory_space<vmem>>, vector<1x1x8x16xf32>
    %98 = vector.shape_cast %97 : vector<1x1x8x16xf32> to vector<8x16xf32>
    %c0_46 = arith.constant 0 : index
    %c4 = arith.constant 4 : index
    %99 = arith.index_cast %13 : i32 to index
    %c0_47 = arith.constant 0 : index
    %100 = vector.load %arg3[%c0_46, %c4, %99, %c0_47] : memref<1x7x16x16xf32, #tpu.memory_space<vmem>>, vector<1x1x8x16xf32>
    %101 = vector.shape_cast %100 : vector<1x1x8x16xf32> to vector<8x16xf32>
    %c0_48 = arith.constant 0 : index
    %c4_49 = arith.constant 4 : index
    %102 = arith.index_cast %13 : i32 to index
    %c0_50 = arith.constant 0 : index
    %103 = vector.load %arg4[%c0_48, %c4_49, %102, %c0_50] : memref<1x7x16x16xf32, #tpu.memory_space<vmem>>, vector<1x1x8x16xf32>
    %104 = vector.shape_cast %103 : vector<1x1x8x16xf32> to vector<8x16xf32>
    %c0_51 = arith.constant 0 : index
    %c5 = arith.constant 5 : index
    %105 = arith.index_cast %13 : i32 to index
    %c0_52 = arith.constant 0 : index
    %106 = vector.load %arg3[%c0_51, %c5, %105, %c0_52] : memref<1x7x16x16xf32, #tpu.memory_space<vmem>>, vector<1x1x8x16xf32>
    %107 = vector.shape_cast %106 : vector<1x1x8x16xf32> to vector<8x16xf32>
    %c0_53 = arith.constant 0 : index
    %c5_54 = arith.constant 5 : index
    %108 = arith.index_cast %13 : i32 to index
    %c0_55 = arith.constant 0 : index
    %109 = vector.load %arg4[%c0_53, %c5_54, %108, %c0_55] : memref<1x7x16x16xf32, #tpu.memory_space<vmem>>, vector<1x1x8x16xf32>
    %110 = vector.shape_cast %109 : vector<1x1x8x16xf32> to vector<8x16xf32>
    %c0_56 = arith.constant 0 : index
    %c6 = arith.constant 6 : index
    %111 = arith.index_cast %13 : i32 to index
    %c0_57 = arith.constant 0 : index
    %112 = vector.load %arg3[%c0_56, %c6, %111, %c0_57] : memref<1x7x16x16xf32, #tpu.memory_space<vmem>>, vector<1x1x8x16xf32>
    %113 = vector.shape_cast %112 : vector<1x1x8x16xf32> to vector<8x16xf32>
    %c0_58 = arith.constant 0 : index
    %c6_59 = arith.constant 6 : index
    %114 = arith.index_cast %13 : i32 to index
    %c0_60 = arith.constant 0 : index
    %115 = vector.load %arg4[%c0_58, %c6_59, %114, %c0_60] : memref<1x7x16x16xf32, #tpu.memory_space<vmem>>, vector<1x1x8x16xf32>
    %116 = vector.shape_cast %115 : vector<1x1x8x16xf32> to vector<8x16xf32>
    %117 = arith.subf %98, %95 : vector<8x16xf32>
    %118 = math.absf %117 : vector<8x16xf32>
    %cst_61 = arith.constant 1.000000e+00 : f32
    %119 = vector.broadcast %cst_61 : f32 to vector<8x16xf32>
    %120 = arith.cmpf olt, %118, %119 : vector<8x16xf32>
    %cst_62 = arith.constant 5.000000e-01 : f32
    %121 = vector.broadcast %cst_62 : f32 to vector<8x16xf32>
    %122 = arith.mulf %121, %118 : vector<8x16xf32>
    %123 = arith.mulf %122, %118 : vector<8x16xf32>
    %cst_63 = arith.constant 5.000000e-01 : f32
    %124 = vector.broadcast %cst_63 : f32 to vector<8x16xf32>
    %125 = arith.subf %118, %124 : vector<8x16xf32>
    %126 = arith.select %120, %123, %125 : vector<8x16xi1>, vector<8x16xf32>
    %127 = arith.subf %104, %101 : vector<8x16xf32>
    %128 = math.absf %127 : vector<8x16xf32>
    %cst_64 = arith.constant 1.000000e+00 : f32
    %129 = vector.broadcast %cst_64 : f32 to vector<8x16xf32>
    %130 = arith.cmpf olt, %128, %129 : vector<8x16xf32>
    %cst_65 = arith.constant 5.000000e-01 : f32
    %131 = vector.broadcast %cst_65 : f32 to vector<8x16xf32>
    %132 = arith.mulf %131, %128 : vector<8x16xf32>
    %133 = arith.mulf %132, %128 : vector<8x16xf32>
    %cst_66 = arith.constant 5.000000e-01 : f32
    %134 = vector.broadcast %cst_66 : f32 to vector<8x16xf32>
    %135 = arith.subf %128, %134 : vector<8x16xf32>
    %136 = arith.select %130, %133, %135 : vector<8x16xi1>, vector<8x16xf32>
    %137 = arith.addf %126, %136 : vector<8x16xf32>
    %138 = arith.subf %110, %107 : vector<8x16xf32>
    %139 = math.absf %138 : vector<8x16xf32>
    %cst_67 = arith.constant 1.000000e+00 : f32
    %140 = vector.broadcast %cst_67 : f32 to vector<8x16xf32>
    %141 = arith.cmpf olt, %139, %140 : vector<8x16xf32>
    %cst_68 = arith.constant 5.000000e-01 : f32
    %142 = vector.broadcast %cst_68 : f32 to vector<8x16xf32>
    %143 = arith.mulf %142, %139 : vector<8x16xf32>
    %144 = arith.mulf %143, %139 : vector<8x16xf32>
    %cst_69 = arith.constant 5.000000e-01 : f32
    %145 = vector.broadcast %cst_69 : f32 to vector<8x16xf32>
    %146 = arith.subf %139, %145 : vector<8x16xf32>
    %147 = arith.select %141, %144, %146 : vector<8x16xi1>, vector<8x16xf32>
    %148 = arith.addf %137, %147 : vector<8x16xf32>
    %149 = arith.subf %116, %113 : vector<8x16xf32>
    %150 = math.absf %149 : vector<8x16xf32>
    %cst_70 = arith.constant 1.000000e+00 : f32
    %151 = vector.broadcast %cst_70 : f32 to vector<8x16xf32>
    %152 = arith.cmpf olt, %150, %151 : vector<8x16xf32>
    %cst_71 = arith.constant 5.000000e-01 : f32
    %153 = vector.broadcast %cst_71 : f32 to vector<8x16xf32>
    %154 = arith.mulf %153, %150 : vector<8x16xf32>
    %155 = arith.mulf %154, %150 : vector<8x16xf32>
    %cst_72 = arith.constant 5.000000e-01 : f32
    %156 = vector.broadcast %cst_72 : f32 to vector<8x16xf32>
    %157 = arith.subf %150, %156 : vector<8x16xf32>
    %158 = arith.select %152, %155, %157 : vector<8x16xi1>, vector<8x16xf32>
    %159 = arith.addf %148, %158 : vector<8x16xf32>
    %160 = arith.subf %95, %107 : vector<8x16xf32>
    %161 = arith.subf %101, %113 : vector<8x16xf32>
    %162 = arith.mulf %160, %160 : vector<8x16xf32>
    %163 = arith.mulf %161, %161 : vector<8x16xf32>
    %164 = arith.addf %162, %163 : vector<8x16xf32>
    %165 = math.sqrt %164 : vector<8x16xf32>
    %cst_73 = arith.constant 4.000000e+00 : f32
    %166 = vector.broadcast %cst_73 : f32 to vector<8x16xf32>
    %167 = arith.mulf %165, %166 : vector<8x16xf32>
    %cst_74 = arith.constant 9.99999974E-5 : f32
    %168 = vector.broadcast %cst_74 : f32 to vector<8x16xf32>
    %169 = arith.addf %167, %168 : vector<8x16xf32>
    %170 = arith.mulf %159, %92 : vector<8x16xf32>
    %171 = tpu.reciprocal %169 {approx = true} : vector<8x16xf32> -> vector<8x16xf32>
    %172 = arith.mulf %170, %171 : vector<8x16xf32>
    %173 = arith.addf %3, %16 : vector<8x16xf32>
    %174 = arith.addf %4, %33 : vector<8x16xf32>
    %175 = arith.addf %5, %36 : vector<8x16xf32>
    %176 = arith.addf %6, %41 : vector<8x16xf32>
    %177 = arith.addf %7, %80 : vector<8x16xf32>
    %178 = arith.addf %8, %88 : vector<8x16xf32>
    %179 = arith.addf %9, %38 : vector<8x16xf32>
    %180 = arith.addf %10, %172 : vector<8x16xf32>
    %181 = arith.addf %11, %92 : vector<8x16xf32>
    %c1_i32 = arith.constant 1 : i32
    %c8_i32_75 = arith.constant 8 : i32
    %182 = arith.muli %c1_i32, %c8_i32_75 : i32
    %183 = tpu.assume_multiple %182, 8 : i32
    %c0_76 = arith.constant 0 : index
    %c0_77 = arith.constant 0 : index
    %184 = arith.index_cast %183 : i32 to index
    %c0_78 = arith.constant 0 : index
    %185 = vector.load %arg3[%c0_76, %c0_77, %184, %c0_78] : memref<1x7x16x16xf32, #tpu.memory_space<vmem>>, vector<1x1x8x16xf32>
    %186 = vector.shape_cast %185 : vector<1x1x8x16xf32> to vector<8x16xf32>
    %c0_79 = arith.constant 0 : index
    %c0_80 = arith.constant 0 : index
    %187 = arith.index_cast %183 : i32 to index
    %c0_81 = arith.constant 0 : index
    %188 = vector.load %arg4[%c0_79, %c0_80, %187, %c0_81] : memref<1x7x16x16xf32, #tpu.memory_space<vmem>>, vector<1x1x8x16xf32>
    %189 = vector.shape_cast %188 : vector<1x1x8x16xf32> to vector<8x16xf32>
    %cst_82 = arith.constant 1.000000e+00 : f32
    %190 = vector.broadcast %cst_82 : f32 to vector<8x16xf32>
    %191 = arith.cmpf oeq, %186, %190 : vector<8x16xf32>
    %cst_83 = arith.constant 0.000000e+00 : f32
    %192 = vector.broadcast %cst_83 : f32 to vector<8x16xf32>
    %193 = arith.subf %192, %189 : vector<8x16xf32>
    %194 = arith.select %191, %189, %193 : vector<8x16xi1>, vector<8x16xf32>
    %195 = arith.negf %194 : vector<8x16xf32>
    %196 = math.exp %195 : vector<8x16xf32>
    %cst_84 = arith.constant 1.000000e+00 : f32
    %197 = vector.broadcast %cst_84 : f32 to vector<8x16xf32>
    %198 = arith.addf %197, %196 : vector<8x16xf32>
    %199 = arith.divf %197, %198 : vector<8x16xf32>
    %cst_85 = arith.constant 9.99999974E-5 : f32
    %200 = vector.broadcast %cst_85 : f32 to vector<8x16xf32>
    %201 = arith.addf %199, %200 : vector<8x16xf32>
    %202 = math.log %201 : vector<8x16xf32>
    %203 = arith.mulf %186, %202 : vector<8x16xf32>
    %cst_86 = arith.constant 1.000000e+00 : f32
    %204 = vector.broadcast %cst_86 : f32 to vector<8x16xf32>
    %205 = arith.subf %204, %186 : vector<8x16xf32>
    %206 = arith.mulf %205, %202 : vector<8x16xf32>
    %207 = arith.extui %191 : vector<8x16xi1> to vector<8x16xi32>
    %208 = arith.sitofp %207 : vector<8x16xi32> to vector<8x16xf32>
    %c0_87 = arith.constant 0 : index
    %c1_88 = arith.constant 1 : index
    %209 = arith.index_cast %183 : i32 to index
    %c0_89 = arith.constant 0 : index
    %210 = vector.load %arg3[%c0_87, %c1_88, %209, %c0_89] : memref<1x7x16x16xf32, #tpu.memory_space<vmem>>, vector<1x1x8x16xf32>
    %211 = vector.shape_cast %210 : vector<1x1x8x16xf32> to vector<8x16xf32>
    %c0_90 = arith.constant 0 : index
    %c1_91 = arith.constant 1 : index
    %212 = arith.index_cast %183 : i32 to index
    %c0_92 = arith.constant 0 : index
    %213 = vector.load %arg4[%c0_90, %c1_91, %212, %c0_92] : memref<1x7x16x16xf32, #tpu.memory_space<vmem>>, vector<1x1x8x16xf32>
    %214 = vector.shape_cast %213 : vector<1x1x8x16xf32> to vector<8x16xf32>
    %c0_93 = arith.constant 0 : index
    %c2_94 = arith.constant 2 : index
    %215 = arith.index_cast %183 : i32 to index
    %c0_95 = arith.constant 0 : index
    %216 = vector.load %arg3[%c0_93, %c2_94, %215, %c0_95] : memref<1x7x16x16xf32, #tpu.memory_space<vmem>>, vector<1x1x8x16xf32>
    %217 = vector.shape_cast %216 : vector<1x1x8x16xf32> to vector<8x16xf32>
    %c0_96 = arith.constant 0 : index
    %c2_97 = arith.constant 2 : index
    %218 = arith.index_cast %183 : i32 to index
    %c0_98 = arith.constant 0 : index
    %219 = vector.load %arg4[%c0_96, %c2_97, %218, %c0_98] : memref<1x7x16x16xf32, #tpu.memory_space<vmem>>, vector<1x1x8x16xf32>
    %220 = vector.shape_cast %219 : vector<1x1x8x16xf32> to vector<8x16xf32>
    %cst_99 = arith.constant 1.000000e+00 : f32
    %221 = vector.broadcast %cst_99 : f32 to vector<8x16xf32>
    %222 = arith.cmpf oeq, %211, %221 : vector<8x16xf32>
    %cst_100 = arith.constant 0.000000e+00 : f32
    %223 = vector.broadcast %cst_100 : f32 to vector<8x16xf32>
    %224 = arith.subf %223, %214 : vector<8x16xf32>
    %225 = arith.select %222, %214, %224 : vector<8x16xi1>, vector<8x16xf32>
    %226 = arith.negf %225 : vector<8x16xf32>
    %227 = math.exp %226 : vector<8x16xf32>
    %cst_101 = arith.constant 1.000000e+00 : f32
    %228 = vector.broadcast %cst_101 : f32 to vector<8x16xf32>
    %229 = arith.addf %228, %227 : vector<8x16xf32>
    %230 = arith.divf %228, %229 : vector<8x16xf32>
    %cst_102 = arith.constant 9.99999974E-5 : f32
    %231 = vector.broadcast %cst_102 : f32 to vector<8x16xf32>
    %232 = arith.addf %230, %231 : vector<8x16xf32>
    %233 = math.log %232 : vector<8x16xf32>
    %cst_103 = arith.constant 1.000000e+00 : f32
    %234 = vector.broadcast %cst_103 : f32 to vector<8x16xf32>
    %235 = arith.cmpf oeq, %217, %234 : vector<8x16xf32>
    %cst_104 = arith.constant 0.000000e+00 : f32
    %236 = vector.broadcast %cst_104 : f32 to vector<8x16xf32>
    %237 = arith.subf %236, %220 : vector<8x16xf32>
    %238 = arith.select %235, %220, %237 : vector<8x16xi1>, vector<8x16xf32>
    %239 = arith.negf %238 : vector<8x16xf32>
    %240 = math.exp %239 : vector<8x16xf32>
    %cst_105 = arith.constant 1.000000e+00 : f32
    %241 = vector.broadcast %cst_105 : f32 to vector<8x16xf32>
    %242 = arith.addf %241, %240 : vector<8x16xf32>
    %243 = arith.divf %241, %242 : vector<8x16xf32>
    %cst_106 = arith.constant 9.99999974E-5 : f32
    %244 = vector.broadcast %cst_106 : f32 to vector<8x16xf32>
    %245 = arith.addf %243, %244 : vector<8x16xf32>
    %246 = math.log %245 : vector<8x16xf32>
    %247 = arith.mulf %211, %233 : vector<8x16xf32>
    %248 = arith.mulf %217, %246 : vector<8x16xf32>
    %249 = arith.addf %247, %248 : vector<8x16xf32>
    %250 = arith.mulf %249, %208 : vector<8x16xf32>
    %cst_107 = arith.constant 1.000000e+00 : f32
    %251 = vector.broadcast %cst_107 : f32 to vector<8x16xf32>
    %252 = arith.subf %251, %211 : vector<8x16xf32>
    %253 = arith.mulf %252, %233 : vector<8x16xf32>
    %cst_108 = arith.constant 1.000000e+00 : f32
    %254 = vector.broadcast %cst_108 : f32 to vector<8x16xf32>
    %255 = arith.subf %254, %217 : vector<8x16xf32>
    %256 = arith.mulf %255, %246 : vector<8x16xf32>
    %257 = arith.addf %253, %256 : vector<8x16xf32>
    %258 = arith.mulf %257, %208 : vector<8x16xf32>
    %cst_109 = arith.constant 1.000000e+00 : f32
    %259 = vector.broadcast %cst_109 : f32 to vector<8x16xf32>
    %260 = arith.cmpf oeq, %211, %259 : vector<8x16xf32>
    %261 = arith.extui %260 : vector<8x16xi1> to vector<8x16xi32>
    %262 = arith.sitofp %261 : vector<8x16xi32> to vector<8x16xf32>
    %c0_110 = arith.constant 0 : index
    %c3_111 = arith.constant 3 : index
    %263 = arith.index_cast %183 : i32 to index
    %c0_112 = arith.constant 0 : index
    %264 = vector.load %arg3[%c0_110, %c3_111, %263, %c0_112] : memref<1x7x16x16xf32, #tpu.memory_space<vmem>>, vector<1x1x8x16xf32>
    %265 = vector.shape_cast %264 : vector<1x1x8x16xf32> to vector<8x16xf32>
    %c0_113 = arith.constant 0 : index
    %c3_114 = arith.constant 3 : index
    %266 = arith.index_cast %183 : i32 to index
    %c0_115 = arith.constant 0 : index
    %267 = vector.load %arg4[%c0_113, %c3_114, %266, %c0_115] : memref<1x7x16x16xf32, #tpu.memory_space<vmem>>, vector<1x1x8x16xf32>
    %268 = vector.shape_cast %267 : vector<1x1x8x16xf32> to vector<8x16xf32>
    %c0_116 = arith.constant 0 : index
    %c4_117 = arith.constant 4 : index
    %269 = arith.index_cast %183 : i32 to index
    %c0_118 = arith.constant 0 : index
    %270 = vector.load %arg3[%c0_116, %c4_117, %269, %c0_118] : memref<1x7x16x16xf32, #tpu.memory_space<vmem>>, vector<1x1x8x16xf32>
    %271 = vector.shape_cast %270 : vector<1x1x8x16xf32> to vector<8x16xf32>
    %c0_119 = arith.constant 0 : index
    %c4_120 = arith.constant 4 : index
    %272 = arith.index_cast %183 : i32 to index
    %c0_121 = arith.constant 0 : index
    %273 = vector.load %arg4[%c0_119, %c4_120, %272, %c0_121] : memref<1x7x16x16xf32, #tpu.memory_space<vmem>>, vector<1x1x8x16xf32>
    %274 = vector.shape_cast %273 : vector<1x1x8x16xf32> to vector<8x16xf32>
    %c0_122 = arith.constant 0 : index
    %c5_123 = arith.constant 5 : index
    %275 = arith.index_cast %183 : i32 to index
    %c0_124 = arith.constant 0 : index
    %276 = vector.load %arg3[%c0_122, %c5_123, %275, %c0_124] : memref<1x7x16x16xf32, #tpu.memory_space<vmem>>, vector<1x1x8x16xf32>
    %277 = vector.shape_cast %276 : vector<1x1x8x16xf32> to vector<8x16xf32>
    %c0_125 = arith.constant 0 : index
    %c5_126 = arith.constant 5 : index
    %278 = arith.index_cast %183 : i32 to index
    %c0_127 = arith.constant 0 : index
    %279 = vector.load %arg4[%c0_125, %c5_126, %278, %c0_127] : memref<1x7x16x16xf32, #tpu.memory_space<vmem>>, vector<1x1x8x16xf32>
    %280 = vector.shape_cast %279 : vector<1x1x8x16xf32> to vector<8x16xf32>
    %c0_128 = arith.constant 0 : index
    %c6_129 = arith.constant 6 : index
    %281 = arith.index_cast %183 : i32 to index
    %c0_130 = arith.constant 0 : index
    %282 = vector.load %arg3[%c0_128, %c6_129, %281, %c0_130] : memref<1x7x16x16xf32, #tpu.memory_space<vmem>>, vector<1x1x8x16xf32>
    %283 = vector.shape_cast %282 : vector<1x1x8x16xf32> to vector<8x16xf32>
    %c0_131 = arith.constant 0 : index
    %c6_132 = arith.constant 6 : index
    %284 = arith.index_cast %183 : i32 to index
    %c0_133 = arith.constant 0 : index
    %285 = vector.load %arg4[%c0_131, %c6_132, %284, %c0_133] : memref<1x7x16x16xf32, #tpu.memory_space<vmem>>, vector<1x1x8x16xf32>
    %286 = vector.shape_cast %285 : vector<1x1x8x16xf32> to vector<8x16xf32>
    %287 = arith.subf %268, %265 : vector<8x16xf32>
    %288 = math.absf %287 : vector<8x16xf32>
    %cst_134 = arith.constant 1.000000e+00 : f32
    %289 = vector.broadcast %cst_134 : f32 to vector<8x16xf32>
    %290 = arith.cmpf olt, %288, %289 : vector<8x16xf32>
    %cst_135 = arith.constant 5.000000e-01 : f32
    %291 = vector.broadcast %cst_135 : f32 to vector<8x16xf32>
    %292 = arith.mulf %291, %288 : vector<8x16xf32>
    %293 = arith.mulf %292, %288 : vector<8x16xf32>
    %cst_136 = arith.constant 5.000000e-01 : f32
    %294 = vector.broadcast %cst_136 : f32 to vector<8x16xf32>
    %295 = arith.subf %288, %294 : vector<8x16xf32>
    %296 = arith.select %290, %293, %295 : vector<8x16xi1>, vector<8x16xf32>
    %297 = arith.subf %274, %271 : vector<8x16xf32>
    %298 = math.absf %297 : vector<8x16xf32>
    %cst_137 = arith.constant 1.000000e+00 : f32
    %299 = vector.broadcast %cst_137 : f32 to vector<8x16xf32>
    %300 = arith.cmpf olt, %298, %299 : vector<8x16xf32>
    %cst_138 = arith.constant 5.000000e-01 : f32
    %301 = vector.broadcast %cst_138 : f32 to vector<8x16xf32>
    %302 = arith.mulf %301, %298 : vector<8x16xf32>
    %303 = arith.mulf %302, %298 : vector<8x16xf32>
    %cst_139 = arith.constant 5.000000e-01 : f32
    %304 = vector.broadcast %cst_139 : f32 to vector<8x16xf32>
    %305 = arith.subf %298, %304 : vector<8x16xf32>
    %306 = arith.select %300, %303, %305 : vector<8x16xi1>, vector<8x16xf32>
    %307 = arith.addf %296, %306 : vector<8x16xf32>
    %308 = arith.subf %280, %277 : vector<8x16xf32>
    %309 = math.absf %308 : vector<8x16xf32>
    %cst_140 = arith.constant 1.000000e+00 : f32
    %310 = vector.broadcast %cst_140 : f32 to vector<8x16xf32>
    %311 = arith.cmpf olt, %309, %310 : vector<8x16xf32>
    %cst_141 = arith.constant 5.000000e-01 : f32
    %312 = vector.broadcast %cst_141 : f32 to vector<8x16xf32>
    %313 = arith.mulf %312, %309 : vector<8x16xf32>
    %314 = arith.mulf %313, %309 : vector<8x16xf32>
    %cst_142 = arith.constant 5.000000e-01 : f32
    %315 = vector.broadcast %cst_142 : f32 to vector<8x16xf32>
    %316 = arith.subf %309, %315 : vector<8x16xf32>
    %317 = arith.select %311, %314, %316 : vector<8x16xi1>, vector<8x16xf32>
    %318 = arith.addf %307, %317 : vector<8x16xf32>
    %319 = arith.subf %286, %283 : vector<8x16xf32>
    %320 = math.absf %319 : vector<8x16xf32>
    %cst_143 = arith.constant 1.000000e+00 : f32
    %321 = vector.broadcast %cst_143 : f32 to vector<8x16xf32>
    %322 = arith.cmpf olt, %320, %321 : vector<8x16xf32>
    %cst_144 = arith.constant 5.000000e-01 : f32
    %323 = vector.broadcast %cst_144 : f32 to vector<8x16xf32>
    %324 = arith.mulf %323, %320 : vector<8x16xf32>
    %325 = arith.mulf %324, %320 : vector<8x16xf32>
    %cst_145 = arith.constant 5.000000e-01 : f32
    %326 = vector.broadcast %cst_145 : f32 to vector<8x16xf32>
    %327 = arith.subf %320, %326 : vector<8x16xf32>
    %328 = arith.select %322, %325, %327 : vector<8x16xi1>, vector<8x16xf32>
    %329 = arith.addf %318, %328 : vector<8x16xf32>
    %330 = arith.subf %265, %277 : vector<8x16xf32>
    %331 = arith.subf %271, %283 : vector<8x16xf32>
    %332 = arith.mulf %330, %330 : vector<8x16xf32>
    %333 = arith.mulf %331, %331 : vector<8x16xf32>
    %334 = arith.addf %332, %333 : vector<8x16xf32>
    %335 = math.sqrt %334 : vector<8x16xf32>
    %cst_146 = arith.constant 4.000000e+00 : f32
    %336 = vector.broadcast %cst_146 : f32 to vector<8x16xf32>
    %337 = arith.mulf %335, %336 : vector<8x16xf32>
    %cst_147 = arith.constant 9.99999974E-5 : f32
    %338 = vector.broadcast %cst_147 : f32 to vector<8x16xf32>
    %339 = arith.addf %337, %338 : vector<8x16xf32>
    %340 = arith.mulf %329, %262 : vector<8x16xf32>
    %341 = tpu.reciprocal %339 {approx = true} : vector<8x16xf32> -> vector<8x16xf32>
    %342 = arith.mulf %340, %341 : vector<8x16xf32>
    %343 = arith.addf %173, %186 : vector<8x16xf32>
    %344 = arith.addf %174, %203 : vector<8x16xf32>
    %345 = arith.addf %175, %206 : vector<8x16xf32>
    %346 = arith.addf %176, %211 : vector<8x16xf32>
    %347 = arith.addf %177, %250 : vector<8x16xf32>
    %348 = arith.addf %178, %258 : vector<8x16xf32>
    %349 = arith.addf %179, %208 : vector<8x16xf32>
    %350 = arith.addf %180, %342 : vector<8x16xf32>
    %351 = arith.addf %181, %262 : vector<8x16xf32>
    %c2_i32 = arith.constant 2 : i32
    %c0_148 = arith.constant 0 : index
    %c0_149 = arith.constant 0 : index
    %c0_150 = arith.constant 0 : index
    %c0_151 = arith.constant 0 : index
    %352 = vector.load %arg5[%c0_148, %c0_149, %c0_150, %c0_151] : memref<1x9x8x16xf32, #tpu.memory_space<vmem>>, vector<1x1x8x16xf32>
    %353 = vector.shape_cast %352 : vector<1x1x8x16xf32> to vector<8x16xf32>
    %354 = arith.addf %353, %343 : vector<8x16xf32>
    %c0_152 = arith.constant 0 : index
    %c0_153 = arith.constant 0 : index
    %c0_154 = arith.constant 0 : index
    %c0_155 = arith.constant 0 : index
    %355 = vector.load %arg5[%c0_152, %c0_153, %c0_154, %c0_155] : memref<1x9x8x16xf32, #tpu.memory_space<vmem>>, vector<1x1x8x16xf32>
    %356 = vector.shape_cast %355 : vector<1x1x8x16xf32> to vector<8x16xf32>
    %357 = vector.shape_cast %354 : vector<8x16xf32> to vector<1x1x8x16xf32>
    tpu.vector_store %arg5[%c0_152, %c0_153, %c0_154, %c0_155], %357 {strides = array<i32>} : memref<1x9x8x16xf32, #tpu.memory_space<vmem>>, vector<1x1x8x16xf32>,
    %c0_156 = arith.constant 0 : index
    %c1_157 = arith.constant 1 : index
    %c0_158 = arith.constant 0 : index
    %c0_159 = arith.constant 0 : index
    %358 = vector.load %arg5[%c0_156, %c1_157, %c0_158, %c0_159] : memref<1x9x8x16xf32, #tpu.memory_space<vmem>>, vector<1x1x8x16xf32>
    %359 = vector.shape_cast %358 : vector<1x1x8x16xf32> to vector<8x16xf32>
    %360 = arith.addf %359, %344 : vector<8x16xf32>
    %c0_160 = arith.constant 0 : index
    %c1_161 = arith.constant 1 : index
    %c0_162 = arith.constant 0 : index
    %c0_163 = arith.constant 0 : index
    %361 = vector.load %arg5[%c0_160, %c1_161, %c0_162, %c0_163] : memref<1x9x8x16xf32, #tpu.memory_space<vmem>>, vector<1x1x8x16xf32>
    %362 = vector.shape_cast %361 : vector<1x1x8x16xf32> to vector<8x16xf32>
    %363 = vector.shape_cast %360 : vector<8x16xf32> to vector<1x1x8x16xf32>
    tpu.vector_store %arg5[%c0_160, %c1_161, %c0_162, %c0_163], %363 {strides = array<i32>} : memref<1x9x8x16xf32, #tpu.memory_space<vmem>>, vector<1x1x8x16xf32>,
    %c0_164 = arith.constant 0 : index
    %c2_165 = arith.constant 2 : index
    %c0_166 = arith.constant 0 : index
    %c0_167 = arith.constant 0 : index
    %364 = vector.load %arg5[%c0_164, %c2_165, %c0_166, %c0_167] : memref<1x9x8x16xf32, #tpu.memory_space<vmem>>, vector<1x1x8x16xf32>
    %365 = vector.shape_cast %364 : vector<1x1x8x16xf32> to vector<8x16xf32>
    %366 = arith.addf %365, %345 : vector<8x16xf32>
    %c0_168 = arith.constant 0 : index
    %c2_169 = arith.constant 2 : index
    %c0_170 = arith.constant 0 : index
    %c0_171 = arith.constant 0 : index
    %367 = vector.load %arg5[%c0_168, %c2_169, %c0_170, %c0_171] : memref<1x9x8x16xf32, #tpu.memory_space<vmem>>, vector<1x1x8x16xf32>
    %368 = vector.shape_cast %367 : vector<1x1x8x16xf32> to vector<8x16xf32>
    %369 = vector.shape_cast %366 : vector<8x16xf32> to vector<1x1x8x16xf32>
    tpu.vector_store %arg5[%c0_168, %c2_169, %c0_170, %c0_171], %369 {strides = array<i32>} : memref<1x9x8x16xf32, #tpu.memory_space<vmem>>, vector<1x1x8x16xf32>,
    %c0_172 = arith.constant 0 : index
    %c3_173 = arith.constant 3 : index
    %c0_174 = arith.constant 0 : index
    %c0_175 = arith.constant 0 : index
    %370 = vector.load %arg5[%c0_172, %c3_173, %c0_174, %c0_175] : memref<1x9x8x16xf32, #tpu.memory_space<vmem>>, vector<1x1x8x16xf32>
    %371 = vector.shape_cast %370 : vector<1x1x8x16xf32> to vector<8x16xf32>
    %372 = arith.addf %371, %346 : vector<8x16xf32>
    %c0_176 = arith.constant 0 : index
    %c3_177 = arith.constant 3 : index
    %c0_178 = arith.constant 0 : index
    %c0_179 = arith.constant 0 : index
    %373 = vector.load %arg5[%c0_176, %c3_177, %c0_178, %c0_179] : memref<1x9x8x16xf32, #tpu.memory_space<vmem>>, vector<1x1x8x16xf32>
    %374 = vector.shape_cast %373 : vector<1x1x8x16xf32> to vector<8x16xf32>
    %375 = vector.shape_cast %372 : vector<8x16xf32> to vector<1x1x8x16xf32>
    tpu.vector_store %arg5[%c0_176, %c3_177, %c0_178, %c0_179], %375 {strides = array<i32>} : memref<1x9x8x16xf32, #tpu.memory_space<vmem>>, vector<1x1x8x16xf32>,
    %c0_180 = arith.constant 0 : index
    %c4_181 = arith.constant 4 : index
    %c0_182 = arith.constant 0 : index
    %c0_183 = arith.constant 0 : index
    %376 = vector.load %arg5[%c0_180, %c4_181, %c0_182, %c0_183] : memref<1x9x8x16xf32, #tpu.memory_space<vmem>>, vector<1x1x8x16xf32>
    %377 = vector.shape_cast %376 : vector<1x1x8x16xf32> to vector<8x16xf32>
    %378 = arith.addf %377, %347 : vector<8x16xf32>
    %c0_184 = arith.constant 0 : index
    %c4_185 = arith.constant 4 : index
    %c0_186 = arith.constant 0 : index
    %c0_187 = arith.constant 0 : index
    %379 = vector.load %arg5[%c0_184, %c4_185, %c0_186, %c0_187] : memref<1x9x8x16xf32, #tpu.memory_space<vmem>>, vector<1x1x8x16xf32>
    %380 = vector.shape_cast %379 : vector<1x1x8x16xf32> to vector<8x16xf32>
    %381 = vector.shape_cast %378 : vector<8x16xf32> to vector<1x1x8x16xf32>
    tpu.vector_store %arg5[%c0_184, %c4_185, %c0_186, %c0_187], %381 {strides = array<i32>} : memref<1x9x8x16xf32, #tpu.memory_space<vmem>>, vector<1x1x8x16xf32>,
    %c0_188 = arith.constant 0 : index
    %c5_189 = arith.constant 5 : index
    %c0_190 = arith.constant 0 : index
    %c0_191 = arith.constant 0 : index
    %382 = vector.load %arg5[%c0_188, %c5_189, %c0_190, %c0_191] : memref<1x9x8x16xf32, #tpu.memory_space<vmem>>, vector<1x1x8x16xf32>
    %383 = vector.shape_cast %382 : vector<1x1x8x16xf32> to vector<8x16xf32>
    %384 = arith.addf %383, %348 : vector<8x16xf32>
    %c0_192 = arith.constant 0 : index
    %c5_193 = arith.constant 5 : index
    %c0_194 = arith.constant 0 : index
    %c0_195 = arith.constant 0 : index
    %385 = vector.load %arg5[%c0_192, %c5_193, %c0_194, %c0_195] : memref<1x9x8x16xf32, #tpu.memory_space<vmem>>, vector<1x1x8x16xf32>
    %386 = vector.shape_cast %385 : vector<1x1x8x16xf32> to vector<8x16xf32>
    %387 = vector.shape_cast %384 : vector<8x16xf32> to vector<1x1x8x16xf32>
    tpu.vector_store %arg5[%c0_192, %c5_193, %c0_194, %c0_195], %387 {strides = array<i32>} : memref<1x9x8x16xf32, #tpu.memory_space<vmem>>, vector<1x1x8x16xf32>,
    %c0_196 = arith.constant 0 : index
    %c6_197 = arith.constant 6 : index
    %c0_198 = arith.constant 0 : index
    %c0_199 = arith.constant 0 : index
    %388 = vector.load %arg5[%c0_196, %c6_197, %c0_198, %c0_199] : memref<1x9x8x16xf32, #tpu.memory_space<vmem>>, vector<1x1x8x16xf32>
    %389 = vector.shape_cast %388 : vector<1x1x8x16xf32> to vector<8x16xf32>
    %390 = arith.addf %389, %349 : vector<8x16xf32>
    %c0_200 = arith.constant 0 : index
    %c6_201 = arith.constant 6 : index
    %c0_202 = arith.constant 0 : index
    %c0_203 = arith.constant 0 : index
    %391 = vector.load %arg5[%c0_200, %c6_201, %c0_202, %c0_203] : memref<1x9x8x16xf32, #tpu.memory_space<vmem>>, vector<1x1x8x16xf32>
    %392 = vector.shape_cast %391 : vector<1x1x8x16xf32> to vector<8x16xf32>
    %393 = vector.shape_cast %390 : vector<8x16xf32> to vector<1x1x8x16xf32>
    tpu.vector_store %arg5[%c0_200, %c6_201, %c0_202, %c0_203], %393 {strides = array<i32>} : memref<1x9x8x16xf32, #tpu.memory_space<vmem>>, vector<1x1x8x16xf32>,
    %c0_204 = arith.constant 0 : index
    %c7 = arith.constant 7 : index
    %c0_205 = arith.constant 0 : index
    %c0_206 = arith.constant 0 : index
    %394 = vector.load %arg5[%c0_204, %c7, %c0_205, %c0_206] : memref<1x9x8x16xf32, #tpu.memory_space<vmem>>, vector<1x1x8x16xf32>
    %395 = vector.shape_cast %394 : vector<1x1x8x16xf32> to vector<8x16xf32>
    %396 = arith.addf %395, %350 : vector<8x16xf32>
    %c0_207 = arith.constant 0 : index
    %c7_208 = arith.constant 7 : index
    %c0_209 = arith.constant 0 : index
    %c0_210 = arith.constant 0 : index
    %397 = vector.load %arg5[%c0_207, %c7_208, %c0_209, %c0_210] : memref<1x9x8x16xf32, #tpu.memory_space<vmem>>, vector<1x1x8x16xf32>
    %398 = vector.shape_cast %397 : vector<1x1x8x16xf32> to vector<8x16xf32>
    %399 = vector.shape_cast %396 : vector<8x16xf32> to vector<1x1x8x16xf32>
    tpu.vector_store %arg5[%c0_207, %c7_208, %c0_209, %c0_210], %399 {strides = array<i32>} : memref<1x9x8x16xf32, #tpu.memory_space<vmem>>, vector<1x1x8x16xf32>,
    %c0_211 = arith.constant 0 : index
    %c8 = arith.constant 8 : index
    %c0_212 = arith.constant 0 : index
    %c0_213 = arith.constant 0 : index
    %400 = vector.load %arg5[%c0_211, %c8, %c0_212, %c0_213] : memref<1x9x8x16xf32, #tpu.memory_space<vmem>>, vector<1x1x8x16xf32>
    %401 = vector.shape_cast %400 : vector<1x1x8x16xf32> to vector<8x16xf32>
    %402 = arith.addf %401, %351 : vector<8x16xf32>
    %c0_214 = arith.constant 0 : index
    %c8_215 = arith.constant 8 : index
    %c0_216 = arith.constant 0 : index
    %c0_217 = arith.constant 0 : index
    %403 = vector.load %arg5[%c0_214, %c8_215, %c0_216, %c0_217] : memref<1x9x8x16xf32, #tpu.memory_space<vmem>>, vector<1x1x8x16xf32>
    %404 = vector.shape_cast %403 : vector<1x1x8x16xf32> to vector<8x16xf32>
    %405 = vector.shape_cast %402 : vector<8x16xf32> to vector<1x1x8x16xf32>
    tpu.vector_store %arg5[%c0_214, %c8_215, %c0_216, %c0_217], %405 {strides = array<i32>} : memref<1x9x8x16xf32, #tpu.memory_space<vmem>>, vector<1x1x8x16xf32>,
    return
  }
  func.func @transform_0(%arg0: i32, %arg1: i32, %arg2: i32) -> (i32, i32, i32, i32) {
    %c1_i32 = arith.constant 1 : i32
    %0 = arith.muli %arg1, %c1_i32 : i32
    %1 = arith.addi %0, %arg2 : i32
    %c0_i32 = arith.constant 0 : i32
    %c0_i32_0 = arith.constant 0 : i32
    %c0_i32_1 = arith.constant 0 : i32
    return %arg0, %c0_i32, %1, %c0_i32_0 : i32, i32, i32, i32
  }
  func.func @transform_1(%arg0: i32, %arg1: i32, %arg2: i32) -> (i32, i32, i32, i32) {
    %c1_i32 = arith.constant 1 : i32
    %0 = arith.muli %arg1, %c1_i32 : i32
    %1 = arith.addi %0, %arg2 : i32
    %c0_i32 = arith.constant 0 : i32
    %c0_i32_0 = arith.constant 0 : i32
    %c0_i32_1 = arith.constant 0 : i32
    return %arg0, %c0_i32, %1, %c0_i32_0 : i32, i32, i32, i32
  }
  func.func @transform_2(%arg0: i32, %arg1: i32, %arg2: i32) -> (i32, i32, i32, i32) {
    %c1_i32 = arith.constant 1 : i32
    %0 = arith.muli %arg0, %c1_i32 : i32
    %1 = arith.addi %0, %arg1 : i32
    %c0_i32 = arith.constant 0 : i32
    %c0_i32_0 = arith.constant 0 : i32
    %c0_i32_1 = arith.constant 0 : i32
    %c0_i32_2 = arith.constant 0 : i32
    return %1, %c0_i32, %c0_i32_0, %c0_i32_1 : i32, i32, i32, i32
  }
}

</mosaic_0001>

<llo_original>
// kernel: tpu_custom_call.1
$region0: #{tpu_custom_call.1}
  #allocation0 [shape = 'u32[]', space=smem, size = 0x4, offset = 0x4, fixed_abs, tag = 'smem constant byte address 0x4 - core index']
  #allocation1 [shape = 'u32[72,128]{1,0:T(1,128)}', space=vmem, size = 0x9000, scoped, tag = 'internal scratch']
  %s0 = inlined_call_operand.hbm [shape: f32[2,7,16,16], index: 0, kind: input, shape index: {}]
  %s1 = inlined_call_operand.hbm [shape: f32[2,7,16,16], index: 1, kind: input, shape index: {}]
  %s2 = inlined_call_operand.hbm [shape: f32[2,9,8,16], index: 2, kind: output, shape index: {}]
  %s3 = sld [smem:[#allocation0]]
  $region53: #{tpu_custom_call.1} parent=0
    _
  %s5 = ssub.s32 1, %s3
  %s6 = scalar_select 0, %s5, %s3
  $region1: #{tpu_custom_call.1} parent=0
    #allocation2 [shape = 'u8[114688]{0}', space=vmem, size = 0x1c000, scoped, tag = 'input window, operand 0']
    #allocation3 [shape = 's32[2]{0}', space=sflag, size = 0x8, scoped, tag = 'scoped memory for tpu_custom_call.1']
    #allocation4 [shape = 's32[2]{0}', space=sflag, size = 0x8, scoped, tag = 'scoped memory for tpu_custom_call.1']
    #allocation5 [shape = 'u8[114688]{0}', space=vmem, size = 0x1c000, scoped, tag = 'input window, operand 1']
    #allocation6 [shape = 's32[2]{0}', space=sflag, size = 0x8, scoped, tag = 'scoped memory for tpu_custom_call.1']
    #allocation7 [shape = 'u8[73728]{0}', space=vmem, size = 0x12000, scoped, tag = 'output window, operand 0']
    %7 = vsyncpa [#allocation3], 0
    %s8 = scalar_lea.sflag [#allocation3], 1
    %9 = vsyncpa %s8, 0
    %10 = vsyncpa [#allocation6], 0
    %s11 = scalar_lea.sflag [#allocation6], 1
    %12 = vsyncpa %s11, 0
    %13 = vsyncpa [#allocation4], 0
    %s14 = scalar_lea.sflag [#allocation4], 1
    %15 = vsyncpa %s14, 0
    loop: start=0, step=1, limit=4
    $region2: #{tpu_custom_call.1} parent=1 // loop_pre_header
      _
    $region3: #{tpu_custom_call.1} parent=1 // loop_header
      %s17 = sphi 0, %s21
      %p18 = scmp.ge.s32.totalorder %s17, 4
      %s24 = sphi 0, %s43
      %s25 = sphi 0, %s39
      %s26 = sphi 0, %s35
      %s27 = sphi 0, %s24
      %s28 = sphi 0, %s25
      %s29 = sphi 0, %s26
      %s30 = sphi 0, %s27
      %s31 = sphi 0, %s28
      %s32 = sphi 0, %s29
      %s50 = sphi 0, %s52
      %s53 = sphi 0, %s50
      %s54 = sphi 0, %s53
      %s70 = sphi 0, %s54
      %s80 = sphi 0, %s82
      %s83 = sphi 0, %s80
      %s84 = sphi 0, %s83
      %s100 = sphi 0, %s84
      %s108 = sphi 0, %s110
      %s111 = sphi 0, %s108
      %s112 = sphi 0, %s111
      %s128 = sphi 0, %s112
    $region4: #{tpu_custom_call.1} parent=1 // loop_header_branch
      %20 = sbr.rel (%p18) target = $region8
    $region5: #{tpu_custom_call.1} parent=1 // loop_body
      %s22 = ssub.s32 %s17, 1
      %s23 = ssub.s32 %s17, 2
      %s33 = sadd.s32 1, %s26
      %p34 = scmp.ge.s32.totalorder %s33, 1
      %s35 = scalar_select %p34, 0, %s33
      %s36 = sadd.s32 1, %s25
      %s37 = scalar_select %p34, %s36, %s25
      %p38 = scmp.ge.s32.totalorder %s37, 1
      %s39 = scalar_select %p38, 0, %s37
      %s40 = sadd.s32 1, %s24
      %s41 = scalar_select %p38, %s40, %s24
      %p42 = scmp.ge.s32.totalorder %s41, 2
      %s43 = scalar_select %p42, 0, %s41
      %s44 = sadd.s32 %s25, %s26
      %s45 = sadd.s32 %s39, %s35
      %s46 = ssub.s32 %s24, %s43
      %s47 = ssub.s32 %s44, %s45
      %s48 = sor.u32 %s46, %s47
      %p49 = scmp.eq.s32.totalorder %s48, 0
      %s51 = sadd.s32 %s50, 1
      %s52 = scalar_select %p49, %s50, %s51
      %p55 = pneg %p49
      %p56 = scmp.eq.s32.totalorder %s17, 1
      %p57 = por %p55, %p56
      %p58 = scmp.ne.s32.totalorder %s50, %s53
      %p59 = scmp.eq.s32.totalorder %s17, 0
      %p60 = por %p58, %p59
      %p61 = scmp.ne.s32.totalorder %s50, %s53
      %p62 = scmp.eq.s32.totalorder %s22, 1
      %p63 = por %p61, %p62
      %p64 = scmp.ne.s32.totalorder %s53, %s54
      %p65 = scmp.eq.s32.totalorder %s22, 0
      %p66 = por %p64, %p65
      %p67 = scmp.ne.s32.totalorder %s53, %s54
      %p68 = scmp.eq.s32.totalorder %s23, 1
      %p69 = por %p67, %p68
      %p71 = scmp.ne.s32.totalorder %s54, %s70
      %p72 = scmp.eq.s32.totalorder %s23, 0
      %p73 = por %p71, %p72
      %s74 = sadd.s32 %s25, %s26
      %s75 = sadd.s32 %s39, %s35
      %s76 = ssub.s32 %s24, %s43
      %s77 = ssub.s32 %s74, %s75
      %s78 = sor.u32 %s76, %s77
      %p79 = scmp.eq.s32.totalorder %s78, 0
      %s81 = sadd.s32 %s80, 1
      %s82 = scalar_select %p79, %s80, %s81
      %p85 = pneg %p79
      %p86 = scmp.eq.s32.totalorder %s17, 1
      %p87 = por %p85, %p86
      %p88 = scmp.ne.s32.totalorder %s80, %s83
      %p89 = scmp.eq.s32.totalorder %s17, 0
      %p90 = por %p88, %p89
      %p91 = scmp.ne.s32.totalorder %s80, %s83
      %p92 = scmp.eq.s32.totalorder %s22, 1
      %p93 = por %p91, %p92
      %p94 = scmp.ne.s32.totalorder %s83, %s84
      %p95 = scmp.eq.s32.totalorder %s22, 0
      %p96 = por %p94, %p95
      %p97 = scmp.ne.s32.totalorder %s83, %s84
      %p98 = scmp.eq.s32.totalorder %s23, 1
      %p99 = por %p97, %p98
      %p101 = scmp.ne.s32.totalorder %s84, %s100
      %p102 = scmp.eq.s32.totalorder %s23, 0
      %p103 = por %p101, %p102
      %s104 = sadd.s32 %s24, %s25
      %s105 = sadd.s32 %s43, %s39
      %s106 = ssub.s32 %s104, %s105
      %p107 = scmp.eq.s32.totalorder %s106, 0
      %s109 = sadd.s32 %s108, 1
      %s110 = scalar_select %p107, %s108, %s109
      %p113 = pneg %p107
      %p114 = scmp.eq.s32.totalorder %s17, 1
      %p115 = por %p113, %p114
      %p116 = scmp.ne.s32.totalorder %s108, %s111
      %p117 = scmp.eq.s32.totalorder %s17, 0
      %p118 = por %p116, %p117
      %p119 = scmp.ne.s32.totalorder %s108, %s111
      %p120 = scmp.eq.s32.totalorder %s22, 1
      %p121 = por %p119, %p120
      %p122 = scmp.ne.s32.totalorder %s111, %s112
      %p123 = scmp.eq.s32.totalorder %s22, 0
      %p124 = por %p122, %p123
      %p125 = scmp.ne.s32.totalorder %s111, %s112
      %p126 = scmp.eq.s32.totalorder %s23, 1
      %p127 = por %p125, %p126
      %p129 = scmp.ne.s32.totalorder %s112, %s128
      %p130 = scmp.eq.s32.totalorder %s23, 0
      %p131 = por %p129, %p130
      %p132 = scmp.le.s32.totalorder 1, %s17
      %p133 = scmp.lt.s32.totalorder %s17, 3
      %p134 = pnand %p132, %p133
      %p135 = pneg %p134
      // Predicated region
      $region9: #{tpu_custom_call.1} parent=5 // pred_check
        _
      $region10: #{tpu_custom_call.1} parent=5 // pred_check_branch
        %137 = sbr.rel (%p134) target = $region12
      $region11: #{tpu_custom_call.1} parent=5 // pred_region
        %s138 = ssub.s32 %s17, 1
      $region12: #{tpu_custom_call.1} parent=5 // pred_fallthru
        _
      %p139 = scmp.lt.s32.totalorder %s17, 2
      // Predicated region
      $region13: #{tpu_custom_call.1} parent=5 // pred_check
        %p140 = pneg %p139
      $region14: #{tpu_custom_call.1} parent=5 // pred_check_branch
        %142 = sbr.rel (%p140) target = $region16
      $region15: #{tpu_custom_call.1} parent=5 // pred_region
        // Predicated region
        $region17: #{tpu_custom_call.1} parent=15 // pred_check
          %p143 = pneg %p60
        $region18: #{tpu_custom_call.1} parent=15 // pred_check_branch
          %145 = sbr.rel (%p143) target = $region20
        $region19: #{tpu_custom_call.1} parent=15 // pred_region
          %s146 = sand.u32 %s50, 1
          %s147 = scalar_lea.sflag [#allocation3], %s146
          %s148 = sand.u32 %s50, 1
          %s149 = smul.addr %s148, 112
          %s150 = scalar_lea.vmem [#allocation2], %s149
          %s151 = sadd.s32 %s25, %s26
          %s152 = smul.u32 2, %s151
          %154 = vsyncadd %s147, 0
          %s155 = smul.addr %s24, 14
          %s156 = sadd.s32 %s152, %s155
          %s157 = smul.addr %s156, 8
          %s158 = scalar_lea.hbm %s0, %s157
          %s159 = sshll.u32 %s158, 4
          %s160 = int_to_ptr.hbm [resolvable:$true] %s159
          %s161 = sshll.u32 %s150, 4
          %s162 = int_to_ptr.vmem [resolvable:$true] %s161
          %167 = dma.hbm_to_vmem [thread:$0]  %s160, 1792, %s162, %s147, 128, 128, 8
        $region20: #{tpu_custom_call.1} parent=15 // pred_fallthru
          _
        // Predicated region
        $region21: #{tpu_custom_call.1} parent=15 // pred_check
          %p168 = pneg %p90
        $region22: #{tpu_custom_call.1} parent=15 // pred_check_branch
          %170 = sbr.rel (%p168) target = $region24
        $region23: #{tpu_custom_call.1} parent=15 // pred_region
          %s171 = sand.u32 %s80, 1
          %s172 = scalar_lea.sflag [#allocation6], %s171
          %s173 = sand.u32 %s80, 1
          %s174 = smul.addr %s173, 112
          %s175 = scalar_lea.vmem [#allocation5], %s174
          %s176 = sadd.s32 %s25, %s26
          %s177 = smul.u32 2, %s176
          %179 = vsyncadd %s172, 0
          %s180 = smul.addr %s24, 14
          %s181 = sadd.s32 %s177, %s180
          %s182 = smul.addr %s181, 8
          %s183 = scalar_lea.hbm %s1, %s182
          %s184 = sshll.u32 %s183, 4
          %s185 = int_to_ptr.hbm [resolvable:$true] %s184
          %s186 = sshll.u32 %s175, 4
          %s187 = int_to_ptr.vmem [resolvable:$true] %s186
          %192 = dma.hbm_to_vmem [thread:$0]  %s185, 1792, %s187, %s172, 128, 128, 8
        $region24: #{tpu_custom_call.1} parent=15 // pred_fallthru
          _
      $region16: #{tpu_custom_call.1} parent=5 // pred_fallthru
        _
      %p193 = scmp.le.s32.totalorder 1, %s17
      %p194 = scmp.lt.s32.totalorder %s17, 3
      %p195 = pnand %p193, %p194
      %p196 = pneg %p195
      // Predicated region
      $region25: #{tpu_custom_call.1} parent=5 // pred_check
        _
      $region26: #{tpu_custom_call.1} parent=5 // pred_check_branch
        %198 = sbr.rel (%p195) target = $region28
      $region27: #{tpu_custom_call.1} parent=5 // pred_region
        %s199 = ssub.s32 %s17, 1
        %s200 = sand.u32 %s53, 1
        %s201 = scalar_lea.sflag [#allocation3], %s200
        %s202 = sand.u32 %s53, 1
        %s203 = smul.addr %s202, 112
        %s204 = scalar_lea.vmem [#allocation2], %s203
        // Predicated region
        $region29: #{tpu_custom_call.1} parent=27 // pred_check
          %p205 = pneg %p66
        $region30: #{tpu_custom_call.1} parent=27 // pred_check_branch
          %207 = sbr.rel (%p205) target = $region32
        $region31: #{tpu_custom_call.1} parent=27 // pred_region
          %209 = dma.done %s201, 1792
        $region32: #{tpu_custom_call.1} parent=27 // pred_fallthru
          _
        %s210 = sand.u32 %s83, 1
        %s211 = scalar_lea.sflag [#allocation6], %s210
        %s212 = sand.u32 %s83, 1
        %s213 = smul.addr %s212, 112
        %s214 = scalar_lea.vmem [#allocation5], %s213
        // Predicated region
        $region33: #{tpu_custom_call.1} parent=27 // pred_check
          %p215 = pneg %p96
        $region34: #{tpu_custom_call.1} parent=27 // pred_check_branch
          %217 = sbr.rel (%p215) target = $region36
        $region35: #{tpu_custom_call.1} parent=27 // pred_region
          %219 = dma.done %s211, 1792
        $region36: #{tpu_custom_call.1} parent=27 // pred_fallthru
          _
        %s220 = sand.u32 %s53, 1
        %s221 = scalar_lea.sflag [#allocation3], %s220
        %s222 = sand.u32 %s53, 1
        %s223 = smul.addr %s222, 112
        %s224 = scalar_lea.vmem [#allocation2], %s223
        %p225 = pneg %p66
        %p226 = pneg %p63
        %s227 = sand.u32 %s83, 1
        %s228 = scalar_lea.sflag [#allocation6], %s227
        %s229 = sand.u32 %s83, 1
        %s230 = smul.addr %s229, 112
        %s231 = scalar_lea.vmem [#allocation5], %s230
        %p232 = pneg %p96
        %p233 = pneg %p93
        %p234 = pneg %p124
        %p235 = pneg %p121
        %s236 = sand.u32 %s111, 1
        %s237 = scalar_lea.sflag [#allocation4], %s236
        %s238 = sand.u32 %s111, 1
        %s239 = smul.addr %s238, 72
        %s240 = scalar_lea.vmem [#allocation7], %s239
        %s241 = sadd.s32 %s28, %s29
        %s242 = smul.u32 2, %s241
        %s243 = sadd.s32 %s28, %s29
        %s244 = smul.u32 2, %s243
        %s245 = sadd.s32 %s27, %s28
        %p246 = scmp.eq.s32.totalorder %s29, 0
        // Predicated region
        $region37: #{tpu_custom_call.1} parent=27 // pred_check
          %p247 = pneg %p246
        $region38: #{tpu_custom_call.1} parent=27 // pred_check_branch
          %249 = sbr.rel (%p247) target = $region40
        $region39: #{tpu_custom_call.1} parent=27 // pred_region
          %vm250 = vcmask 130048
          %251 = vst.msk [vmem:[%s240] sm:$0xff] %vm250, 0.0
          %252 = vst.msk [vmem:[%s240 + $0x8] sm:$0xff] %vm250, 0.0
          %253 = vst.msk [vmem:[%s240 + $0x10] sm:$0xff] %vm250, 0.0
          %254 = vst.msk [vmem:[%s240 + $0x18] sm:$0xff] %vm250, 0.0
          %255 = vst.msk [vmem:[%s240 + $0x20] sm:$0xff] %vm250, 0.0
          %256 = vst.msk [vmem:[%s240 + $0x28] sm:$0xff] %vm250, 0.0
          %257 = vst.msk [vmem:[%s240 + $0x30] sm:$0xff] %vm250, 0.0
          %258 = vst.msk [vmem:[%s240 + $0x38] sm:$0xff] %vm250, 0.0
          %259 = vst.msk [vmem:[%s240 + $0x40] sm:$0xff] %vm250, 0.0
        $region40: #{tpu_custom_call.1} parent=27 // pred_fallthru
          _
        %v260 = vld [vmem:[%s204] sm:$0xff]
        %v261 = vld [vmem:[%s214] sm:$0xff]
        %vm262 = vcmp.eq.f32.partialorder %v260, 1.0
        %v263 = vsub.f32 0.0, %v261
        %v264 = vsel %vm262, %v261, %v263
        %v265 = vxor.u32 %v264, 2147483648
        %v266 = vmul.f32 %v265, 1.442695
        %v267 = vpow.pop %v266
        %v268 = vadd.f32 %v267, 1.0
        %v269 = vrcp.pop %v268
        %v270 = vmul.f32 %v268, %v269
        %v271 = vsub.f32 1.0, %v270
        %v272 = vmul.f32 %v269, %v271
        %v273 = vadd.f32 %v269, %v272
        %vm274 = vweird.f32 %v268
        %vm275 = vweird.f32 %v269
        %vm276 = vmor %vm274, %vm275
        %v277 = vsel %vm276, %v269, %v273
        %v278 = vand.u32 2147483647, %v268
        %vm279 = vcmp.eq.f32.partialorder %v278, 8.507059e+37
        %v280 = vand.u32 %v268, 2147483648
        %v281 = vor.u32 1.1754944e-38, %v280
        %v282 = vsel %vm279, %v281, %v277
        %v283 = vmul.f32 1.0, %v282
        %v284 = vadd.f32 %v283, 0.0001
        %v285 = vlog2.pop %v284
        %v286 = vmul.f32 %v285, 0.6931472
        %v287 = vmul.f32 %v260, %v286
        %v288 = vsub.f32 1.0, %v260
        %v289 = vmul.f32 %v288, %v286
        %v290 = vsel %vm262, 1, 0
        %v291 = vcvt.s32.f32 %v290
        %s292 = sadd.s32 0, 16
        %s293 = scalar_lea.vmem %s204, %s292 [#allocation2]
        %v294 = vld [vmem:[%s293] sm:$0xff]
        %s295 = scalar_lea.vmem %s214, %s292 [#allocation5]
        %v296 = vld [vmem:[%s295] sm:$0xff]
        %s297 = sadd.s32 0, 32
        %s298 = scalar_lea.vmem %s204, %s297 [#allocation2]
        %v299 = vld [vmem:[%s298] sm:$0xff]
        %s300 = scalar_lea.vmem %s214, %s297 [#allocation5]
        %v301 = vld [vmem:[%s300] sm:$0xff]
        %vm302 = vcmp.eq.f32.partialorder %v294, 1.0
        %v303 = vsub.f32 0.0, %v296
        %v304 = vsel %vm302, %v296, %v303
        %v305 = vxor.u32 %v304, 2147483648
        %v306 = vmul.f32 %v305, 1.442695
        %v307 = vpow.pop %v306
        %v308 = vadd.f32 %v307, 1.0
        %v309 = vrcp.pop %v308
        %v310 = vmul.f32 %v308, %v309
        %v311 = vsub.f32 1.0, %v310
        %v312 = vmul.f32 %v309, %v311
        %v313 = vadd.f32 %v309, %v312
        %vm314 = vweird.f32 %v308
        %vm315 = vweird.f32 %v309
        %vm316 = vmor %vm314, %vm315
        %v317 = vsel %vm316, %v309, %v313
        %v318 = vand.u32 2147483647, %v308
        %vm319 = vcmp.eq.f32.partialorder %v318, 8.507059e+37
        %v320 = vand.u32 %v308, 2147483648
        %v321 = vor.u32 1.1754944e-38, %v320
        %v322 = vsel %vm319, %v321, %v317
        %v323 = vmul.f32 1.0, %v322
        %v324 = vadd.f32 %v323, 0.0001
        %v325 = vlog2.pop %v324
        %v326 = vmul.f32 %v325, 0.6931472
        %vm327 = vcmp.eq.f32.partialorder %v299, 1.0
        %v328 = vsub.f32 0.0, %v301
        %v329 = vsel %vm327, %v301, %v328
        %v330 = vxor.u32 %v329, 2147483648
        %v331 = vmul.f32 %v330, 1.442695
        %v332 = vpow.pop %v331
        %v333 = vadd.f32 %v332, 1.0
        %v334 = vrcp.pop %v333
        %v335 = vmul.f32 %v333, %v334
        %v336 = vsub.f32 1.0, %v335
        %v337 = vmul.f32 %v334, %v336
        %v338 = vadd.f32 %v334, %v337
        %vm339 = vweird.f32 %v333
        %vm340 = vweird.f32 %v334
        %vm341 = vmor %vm339, %vm340
        %v342 = vsel %vm341, %v334, %v338
        %v343 = vand.u32 2147483647, %v333
        %vm344 = vcmp.eq.f32.partialorder %v343, 8.507059e+37
        %v345 = vand.u32 %v333, 2147483648
        %v346 = vor.u32 1.1754944e-38, %v345
        %v347 = vsel %vm344, %v346, %v342
        %v348 = vmul.f32 1.0, %v347
        %v349 = vadd.f32 %v348, 0.0001
        %v350 = vlog2.pop %v349
        %v351 = vmul.f32 %v350, 0.6931472
        %v352 = vmul.f32 %v294, %v326
        %v353 = vmul.f32 %v299, %v351
        %v354 = vadd.f32 %v352, %v353
        %v355 = vmul.f32 %v354, %v291
        %v356 = vsub.f32 1.0, %v294
        %v357 = vmul.f32 %v356, %v326
        %v358 = vsub.f32 1.0, %v299
        %v359 = vmul.f32 %v358, %v351
        %v360 = vadd.f32 %v357, %v359
        %v361 = vmul.f32 %v360, %v291
        %v362 = vsel %vm302, 1, 0
        %v363 = vcvt.s32.f32 %v362
        %s364 = sadd.s32 0, 48
        %s365 = scalar_lea.vmem %s204, %s364 [#allocation2]
        %v366 = vld [vmem:[%s365] sm:$0xff]
        %s367 = scalar_lea.vmem %s214, %s364 [#allocation5]
        %v368 = vld [vmem:[%s367] sm:$0xff]
        %s369 = sadd.s32 0, 64
        %s370 = scalar_lea.vmem %s204, %s369 [#allocation2]
        %v371 = vld [vmem:[%s370] sm:$0xff]
        %s372 = scalar_lea.vmem %s214, %s369 [#allocation5]
        %v373 = vld [vmem:[%s372] sm:$0xff]
        %s374 = sadd.s32 0, 80
        %s375 = scalar_lea.vmem %s204, %s374 [#allocation2]
        %v376 = vld [vmem:[%s375] sm:$0xff]
        %s377 = scalar_lea.vmem %s214, %s374 [#allocation5]
        %v378 = vld [vmem:[%s377] sm:$0xff]
        %s379 = sadd.s32 0, 96
        %s380 = scalar_lea.vmem %s204, %s379 [#allocation2]
        %v381 = vld [vmem:[%s380] sm:$0xff]
        %s382 = scalar_lea.vmem %s214, %s379 [#allocation5]
        %v383 = vld [vmem:[%s382] sm:$0xff]
        %v384 = vsub.f32 %v368, %v366
        %v385 = vand.u32 2147483647, %v384
        %vm386 = vcmp.lt.f32.partialorder %v385, 1.0
        %v387 = vmul.f32 %v385, 0.5
        %v388 = vmul.f32 %v387, %v385
        %v389 = vsub.f32 %v385, 0.5
        %v390 = vsel %vm386, %v388, %v389
        %v391 = vsub.f32 %v373, %v371
        %v392 = vand.u32 2147483647, %v391
        %vm393 = vcmp.lt.f32.partialorder %v392, 1.0
        %v394 = vmul.f32 %v392, 0.5
        %v395 = vmul.f32 %v394, %v392
        %v396 = vsub.f32 %v392, 0.5
        %v397 = vsel %vm393, %v395, %v396
        %v398 = vadd.f32 %v390, %v397
        %v399 = vsub.f32 %v378, %v376
        %v400 = vand.u32 2147483647, %v399
        %vm401 = vcmp.lt.f32.partialorder %v400, 1.0
        %v402 = vmul.f32 %v400, 0.5
        %v403 = vmul.f32 %v402, %v400
        %v404 = vsub.f32 %v400, 0.5
        %v405 = vsel %vm401, %v403, %v404
        %v406 = vadd.f32 %v398, %v405
        %v407 = vsub.f32 %v383, %v381
        %v408 = vand.u32 2147483647, %v407
        %vm409 = vcmp.lt.f32.partialorder %v408, 1.0
        %v410 = vmul.f32 %v408, 0.5
        %v411 = vmul.f32 %v410, %v408
        %v412 = vsub.f32 %v408, 0.5
        %v413 = vsel %vm409, %v411, %v412
        %v414 = vadd.f32 %v406, %v413
        %v415 = vsub.f32 %v366, %v376
        %v416 = vsub.f32 %v371, %v381
        %v417 = vmul.f32 %v415, %v415
        %v418 = vmul.f32 %v416, %v416
        %v419 = vadd.f32 %v417, %v418
        %v420 = vrsqrt.pop %v419
        %v421 = vmul.f32 %v420, %v419
        %v422 = vmul.f32 %v421, %v420
        %v423 = vmul.f32 0.5, %v422
        %v424 = vsub.f32 1.5, %v423
        %v425 = vmul.f32 %v420, %v424
        %v426 = vmul.f32 %v419, %v425
        %vm427 = vcmp.eq.f32.partialorder %v419, inf
        %v428 = vsel %vm427, %v419, %v426
        %vm429 = vcmp.eq.f32.partialorder %v419, 0.0
        %v430 = vand.u32 %v419, 2147483648
        %v431 = vsel %vm429, %v430, %v428
        %v432 = vmul.f32 %v431, 4.0
        %v433 = vadd.f32 %v432, 0.0001
        %v434 = vmul.f32 %v414, %v363
        %v435 = vrcp.pop %v433
        %v436 = vmul.f32 %v434, %v435
        %v437 = vadd.f32 %v260, 0.0
        %v438 = vadd.f32 %v287, 0.0
        %v439 = vadd.f32 %v289, 0.0
        %v440 = vadd.f32 %v294, 0.0
        %v441 = vadd.f32 %v355, 0.0
        %v442 = vadd.f32 %v361, 0.0
        %v443 = vadd.f32 %v291, 0.0
        %v444 = vadd.f32 %v436, 0.0
        %v445 = vadd.f32 %v363, 0.0
        %s446 = scalar_lea.vmem %s204, 8 [#allocation2]
        %v447 = vld [vmem:[%s446] sm:$0xff]
        %s448 = scalar_lea.vmem %s214, 8 [#allocation5]
        %v449 = vld [vmem:[%s448] sm:$0xff]
        %vm450 = vcmp.eq.f32.partialorder %v447, 1.0
        %v451 = vsub.f32 0.0, %v449
        %v452 = vsel %vm450, %v449, %v451
        %v453 = vxor.u32 %v452, 2147483648
        %v454 = vmul.f32 %v453, 1.442695
        %v455 = vpow.pop %v454
        %v456 = vadd.f32 %v455, 1.0
        %v457 = vrcp.pop %v456
        %v458 = vmul.f32 %v456, %v457
        %v459 = vsub.f32 1.0, %v458
        %v460 = vmul.f32 %v457, %v459
        %v461 = vadd.f32 %v457, %v460
        %vm462 = vweird.f32 %v456
        %vm463 = vweird.f32 %v457
        %vm464 = vmor %vm462, %vm463
        %v465 = vsel %vm464, %v457, %v461
        %v466 = vand.u32 2147483647, %v456
        %vm467 = vcmp.eq.f32.partialorder %v466, 8.507059e+37
        %v468 = vand.u32 %v456, 2147483648
        %v469 = vor.u32 1.1754944e-38, %v468
        %v470 = vsel %vm467, %v469, %v465
        %v471 = vmul.f32 1.0, %v470
        %v472 = vadd.f32 %v471, 0.0001
        %v473 = vlog2.pop %v472
        %v474 = vmul.f32 %v473, 0.6931472
        %v475 = vmul.f32 %v447, %v474
        %v476 = vsub.f32 1.0, %v447
        %v477 = vmul.f32 %v476, %v474
        %v478 = vsel %vm450, 1, 0
        %v479 = vcvt.s32.f32 %v478
        %s480 = sadd.s32 8, 16
        %s481 = scalar_lea.vmem %s204, %s480 [#allocation2]
        %v482 = vld [vmem:[%s481] sm:$0xff]
        %s483 = scalar_lea.vmem %s214, %s480 [#allocation5]
        %v484 = vld [vmem:[%s483] sm:$0xff]
        %s485 = sadd.s32 8, 32
        %s486 = scalar_lea.vmem %s204, %s485 [#allocation2]
        %v487 = vld [vmem:[%s486] sm:$0xff]
        %s488 = scalar_lea.vmem %s214, %s485 [#allocation5]
        %v489 = vld [vmem:[%s488] sm:$0xff]
        %vm490 = vcmp.eq.f32.partialorder %v482, 1.0
        %v491 = vsub.f32 0.0, %v484
        %v492 = vsel %vm490, %v484, %v491
        %v493 = vxor.u32 %v492, 2147483648
        %v494 = vmul.f32 %v493, 1.442695
        %v495 = vpow.pop %v494
        %v496 = vadd.f32 %v495, 1.0
        %v497 = vrcp.pop %v496
        %v498 = vmul.f32 %v496, %v497
        %v499 = vsub.f32 1.0, %v498
        %v500 = vmul.f32 %v497, %v499
        %v501 = vadd.f32 %v497, %v500
        %vm502 = vweird.f32 %v496
        %vm503 = vweird.f32 %v497
        %vm504 = vmor %vm502, %vm503
        %v505 = vsel %vm504, %v497, %v501
        %v506 = vand.u32 2147483647, %v496
        %vm507 = vcmp.eq.f32.partialorder %v506, 8.507059e+37
        %v508 = vand.u32 %v496, 2147483648
        %v509 = vor.u32 1.1754944e-38, %v508
        %v510 = vsel %vm507, %v509, %v505
        %v511 = vmul.f32 1.0, %v510
        %v512 = vadd.f32 %v511, 0.0001
        %v513 = vlog2.pop %v512
        %v514 = vmul.f32 %v513, 0.6931472
        %vm515 = vcmp.eq.f32.partialorder %v487, 1.0
        %v516 = vsub.f32 0.0, %v489
        %v517 = vsel %vm515, %v489, %v516
        %v518 = vxor.u32 %v517, 2147483648
        %v519 = vmul.f32 %v518, 1.442695
        %v520 = vpow.pop %v519
        %v521 = vadd.f32 %v520, 1.0
        %v522 = vrcp.pop %v521
        %v523 = vmul.f32 %v521, %v522
        %v524 = vsub.f32 1.0, %v523
        %v525 = vmul.f32 %v522, %v524
        %v526 = vadd.f32 %v522, %v525
        %vm527 = vweird.f32 %v521
        %vm528 = vweird.f32 %v522
        %vm529 = vmor %vm527, %vm528
        %v530 = vsel %vm529, %v522, %v526
        %v531 = vand.u32 2147483647, %v521
        %vm532 = vcmp.eq.f32.partialorder %v531, 8.507059e+37
        %v533 = vand.u32 %v521, 2147483648
        %v534 = vor.u32 1.1754944e-38, %v533
        %v535 = vsel %vm532, %v534, %v530
        %v536 = vmul.f32 1.0, %v535
        %v537 = vadd.f32 %v536, 0.0001
        %v538 = vlog2.pop %v537
        %v539 = vmul.f32 %v538, 0.6931472
        %v540 = vmul.f32 %v482, %v514
        %v541 = vmul.f32 %v487, %v539
        %v542 = vadd.f32 %v540, %v541
        %v543 = vmul.f32 %v542, %v479
        %v544 = vsub.f32 1.0, %v482
        %v545 = vmul.f32 %v544, %v514
        %v546 = vsub.f32 1.0, %v487
        %v547 = vmul.f32 %v546, %v539
        %v548 = vadd.f32 %v545, %v547
        %v549 = vmul.f32 %v548, %v479
        %v550 = vsel %vm490, 1, 0
        %v551 = vcvt.s32.f32 %v550
        %s552 = sadd.s32 8, 48
        %s553 = scalar_lea.vmem %s204, %s552 [#allocation2]
        %v554 = vld [vmem:[%s553] sm:$0xff]
        %s555 = scalar_lea.vmem %s214, %s552 [#allocation5]
        %v556 = vld [vmem:[%s555] sm:$0xff]
        %s557 = sadd.s32 8, 64
        %s558 = scalar_lea.vmem %s204, %s557 [#allocation2]
        %v559 = vld [vmem:[%s558] sm:$0xff]
        %s560 = scalar_lea.vmem %s214, %s557 [#allocation5]
        %v561 = vld [vmem:[%s560] sm:$0xff]
        %s562 = sadd.s32 8, 80
        %s563 = scalar_lea.vmem %s204, %s562 [#allocation2]
        %v564 = vld [vmem:[%s563] sm:$0xff]
        %s565 = scalar_lea.vmem %s214, %s562 [#allocation5]
        %v566 = vld [vmem:[%s565] sm:$0xff]
        %s567 = sadd.s32 8, 96
        %s568 = scalar_lea.vmem %s204, %s567 [#allocation2]
        %v569 = vld [vmem:[%s568] sm:$0xff]
        %s570 = scalar_lea.vmem %s214, %s567 [#allocation5]
        %v571 = vld [vmem:[%s570] sm:$0xff]
        %v572 = vsub.f32 %v556, %v554
        %v573 = vand.u32 2147483647, %v572
        %vm574 = vcmp.lt.f32.partialorder %v573, 1.0
        %v575 = vmul.f32 %v573, 0.5
        %v576 = vmul.f32 %v575, %v573
        %v577 = vsub.f32 %v573, 0.5
        %v578 = vsel %vm574, %v576, %v577
        %v579 = vsub.f32 %v561, %v559
        %v580 = vand.u32 2147483647, %v579
        %vm581 = vcmp.lt.f32.partialorder %v580, 1.0
        %v582 = vmul.f32 %v580, 0.5
        %v583 = vmul.f32 %v582, %v580
        %v584 = vsub.f32 %v580, 0.5
        %v585 = vsel %vm581, %v583, %v584
        %v586 = vadd.f32 %v578, %v585
        %v587 = vsub.f32 %v566, %v564
        %v588 = vand.u32 2147483647, %v587
        %vm589 = vcmp.lt.f32.partialorder %v588, 1.0
        %v590 = vmul.f32 %v588, 0.5
        %v591 = vmul.f32 %v590, %v588
        %v592 = vsub.f32 %v588, 0.5
        %v593 = vsel %vm589, %v591, %v592
        %v594 = vadd.f32 %v586, %v593
        %v595 = vsub.f32 %v571, %v569
        %v596 = vand.u32 2147483647, %v595
        %vm597 = vcmp.lt.f32.partialorder %v596, 1.0
        %v598 = vmul.f32 %v596, 0.5
        %v599 = vmul.f32 %v598, %v596
        %v600 = vsub.f32 %v596, 0.5
        %v601 = vsel %vm597, %v599, %v600
        %v602 = vadd.f32 %v594, %v601
        %v603 = vsub.f32 %v554, %v564
        %v604 = vsub.f32 %v559, %v569
        %v605 = vmul.f32 %v603, %v603
        %v606 = vmul.f32 %v604, %v604
        %v607 = vadd.f32 %v605, %v606
        %v608 = vrsqrt.pop %v607
        %v609 = vmul.f32 %v608, %v607
        %v610 = vmul.f32 %v609, %v608
        %v611 = vmul.f32 0.5, %v610
        %v612 = vsub.f32 1.5, %v611
        %v613 = vmul.f32 %v608, %v612
        %v614 = vmul.f32 %v607, %v613
        %vm615 = vcmp.eq.f32.partialorder %v607, inf
        %v616 = vsel %vm615, %v607, %v614
        %vm617 = vcmp.eq.f32.partialorder %v607, 0.0
        %v618 = vand.u32 %v607, 2147483648
        %v619 = vsel %vm617, %v618, %v616
        %v620 = vmul.f32 %v619, 4.0
        %v621 = vadd.f32 %v620, 0.0001
        %v622 = vmul.f32 %v602, %v551
        %v623 = vrcp.pop %v621
        %v624 = vmul.f32 %v622, %v623
        %v625 = vadd.f32 %v437, %v447
        %v626 = vadd.f32 %v438, %v475
        %v627 = vadd.f32 %v439, %v477
        %v628 = vadd.f32 %v440, %v482
        %v629 = vadd.f32 %v441, %v543
        %v630 = vadd.f32 %v442, %v549
        %v631 = vadd.f32 %v443, %v479
        %v632 = vadd.f32 %v444, %v624
        %v633 = vadd.f32 %v445, %v551
        %v634 = vld [vmem:[%s240] sm:$0xff]
        %v635 = vadd.f32 %v634, %v625
        %vm636 = vcmask 130048
        %637 = vst.msk [vmem:[%s240] sm:$0xff] %vm636, %v635
        %s638 = scalar_lea.vmem %s240, 8 [#allocation7]
        %v639 = vld [vmem:[%s638] sm:$0xff]
        %v640 = vadd.f32 %v639, %v626
        %641 = vst.msk [vmem:[%s638] sm:$0xff] %vm636, %v640
        %s642 = scalar_lea.vmem %s240, 16 [#allocation7]
        %v643 = vld [vmem:[%s642] sm:$0xff]
        %v644 = vadd.f32 %v643, %v627
        %645 = vst.msk [vmem:[%s642] sm:$0xff] %vm636, %v644
        %s646 = scalar_lea.vmem %s240, 24 [#allocation7]
        %v647 = vld [vmem:[%s646] sm:$0xff]
        %v648 = vadd.f32 %v647, %v628
        %649 = vst.msk [vmem:[%s646] sm:$0xff] %vm636, %v648
        %s650 = scalar_lea.vmem %s240, 32 [#allocation7]
        %v651 = vld [vmem:[%s650] sm:$0xff]
        %v652 = vadd.f32 %v651, %v629
        %653 = vst.msk [vmem:[%s650] sm:$0xff] %vm636, %v652
        %s654 = scalar_lea.vmem %s240, 40 [#allocation7]
        %v655 = vld [vmem:[%s654] sm:$0xff]
        %v656 = vadd.f32 %v655, %v630
        %657 = vst.msk [vmem:[%s654] sm:$0xff] %vm636, %v656
        %s658 = scalar_lea.vmem %s240, 48 [#allocation7]
        %v659 = vld [vmem:[%s658] sm:$0xff]
        %v660 = vadd.f32 %v659, %v631
        %661 = vst.msk [vmem:[%s658] sm:$0xff] %vm636, %v660
        %s662 = scalar_lea.vmem %s240, 56 [#allocation7]
        %v663 = vld [vmem:[%s662] sm:$0xff]
        %v664 = vadd.f32 %v663, %v632
        %665 = vst.msk [vmem:[%s662] sm:$0xff] %vm636, %v664
        %s666 = scalar_lea.vmem %s240, 64 [#allocation7]
        %v667 = vld [vmem:[%s666] sm:$0xff]
        %v668 = vadd.f32 %v667, %v633
        %669 = vst.msk [vmem:[%s666] sm:$0xff] %vm636, %v668
        %s670 = sand.u32 %s111, 1
        %s671 = scalar_lea.sflag [#allocation4], %s670
        %s672 = sand.u32 %s111, 1
        %s673 = smul.addr %s672, 72
        %s674 = scalar_lea.vmem [#allocation7], %s673
        // Predicated region
        $region41: #{tpu_custom_call.1} parent=27 // pred_check
          %p675 = pneg %p121
        $region42: #{tpu_custom_call.1} parent=27 // pred_check_branch
          %677 = sbr.rel (%p675) target = $region44
        $region43: #{tpu_custom_call.1} parent=27 // pred_region
          %s678 = sadd.s32 %s27, %s28
          %680 = vsyncadd %s671, 0
          %s681 = smul.addr %s678, 9
          %s682 = smul.addr %s681, 8
          %s683 = scalar_lea.hbm %s2, %s682
          %s684 = sshll.u32 %s674, 4
          %s685 = int_to_ptr.vmem [resolvable:$true] %s684
          %s686 = sshll.u32 %s683, 4
          %s687 = int_to_ptr.hbm [resolvable:$true] %s686
          %692 = dma.vmem_to_hbm [thread:$0]  %s685, 1152, %s687, %s671, 128, 128, 8
        $region44: #{tpu_custom_call.1} parent=27 // pred_fallthru
          _
      $region28: #{tpu_custom_call.1} parent=5 // pred_fallthru
        _
      %p693 = scmp.le.s32.totalorder 2, %s17
      // Predicated region
      $region45: #{tpu_custom_call.1} parent=5 // pred_check
        %p694 = pneg %p693
      $region46: #{tpu_custom_call.1} parent=5 // pred_check_branch
        %696 = sbr.rel (%p694) target = $region48
      $region47: #{tpu_custom_call.1} parent=5 // pred_region
        %s697 = ssub.s32 %s17, 2
        // Predicated region
        $region49: #{tpu_custom_call.1} parent=47 // pred_check
          %p698 = pneg %p127
        $region50: #{tpu_custom_call.1} parent=47 // pred_check_branch
          %700 = sbr.rel (%p698) target = $region52
        $region51: #{tpu_custom_call.1} parent=47 // pred_region
          %s701 = sand.u32 %s112, 1
          %s702 = scalar_lea.sflag [#allocation4], %s701
          %s703 = sand.u32 %s112, 1
          %s704 = smul.addr %s703, 72
          %s705 = scalar_lea.vmem [#allocation7], %s704
          %707 = dma.done %s702, 1152
        $region52: #{tpu_custom_call.1} parent=47 // pred_fallthru
          _
      $region48: #{tpu_custom_call.1} parent=5 // pred_fallthru
        _
    $region6: #{tpu_custom_call.1} parent=1 // loop_footer
      %s21 = sadd.s32 1, %s17
    $region7: #{tpu_custom_call.1} parent=1 // loop_footer_branch
      %16 = sbr.rel target = $region3
    $region8: #{tpu_custom_call.1} parent=1 // loop_exit
      _
    %708 = vsyncpa [#allocation3], 1
    %s709 = scalar_lea.sflag [#allocation3], 1
    %710 = vsyncpa %s709, 1
    %711 = vsyncpa [#allocation6], 1
    %s712 = scalar_lea.sflag [#allocation6], 1
    %713 = vsyncpa %s712, 1
    %714 = vsyncpa [#allocation4], 1
    %s715 = scalar_lea.sflag [#allocation4], 1
    %716 = vsyncpa %s715, 1

</llo_original>
